<compile_context>
chip_gen: v5e
topology: v5e:2x2
jax: 0.10.0
libtpu: 0.0.40
codegen_flags: <defaults>
</compile_context>

<pallas_src>
import functools
import math

import jax
import jax.numpy as jnp
from jax.experimental import pallas as pl
from jax.experimental.pallas import tpu as pltpu

_SQRT_HALF = 0.7071067811865476  # 1/sqrt(2)


def _mlp_kernel(x_ref, w1_ref, b1_ref, w2_ref, b2_ref, o_ref, acc_ref, *,
                approximate_gelu):
    # x_ref:  (tm, C)   tile of flattened activations (resident across H axis)
    # w1_ref: (C, tH)   c_fc weight slice (in, out)
    # b1_ref: (1, tH)   c_fc bias slice
    # w2_ref: (tH, C)   c_proj weight slice (in, out)
    # b2_ref: (1, C)    c_proj bias (resident)
    # o_ref:  (tm, C)   output tile (resident across H axis)
    # acc_ref:(tm, C)   f32 accumulator scratch
    h_idx = pl.program_id(1)

    @pl.when(h_idx == 0)
    def _init():
        acc_ref[...] = jnp.zeros_like(acc_ref)

    # c_fc partial: native-dtype operands on the MXU, f32 accumulation.
    h = jnp.dot(x_ref[...], w1_ref[...], preferred_element_type=jnp.float32)
    h = h + b1_ref[...].astype(jnp.float32)

    if approximate_gelu:
        # tanh form: transcendental goes to the EUP slot (free under the MXU).
        h = jax.nn.gelu(h, approximate=True)
    else:
        # Exact (erf) GELU -- matches torch.nn.GELU() default semantics.
        h = 0.5 * h * (1.0 + jax.lax.erf(h * _SQRT_HALF))

    # c_proj partial product for this hidden chunk, accumulated in f32.
    acc_ref[...] += jnp.dot(h.astype(w2_ref.dtype), w2_ref[...],
                            preferred_element_type=jnp.float32)

    @pl.when(h_idx == pl.num_programs(1) - 1)
    def _finalize():
        o_ref[...] = (acc_ref[...] + b2_ref[...].astype(jnp.float32)).astype(o_ref.dtype)


def _vmem_bytes_estimate(tm, th, C, itemsize):
    """Working-set estimate: double-buffered ins/outs + f32 acc + hidden temps."""
    in_bytes = 2 * (tm * C + C * th + th + th * C + C) * itemsize
    out_bytes = 2 * tm * C * itemsize
    acc_bytes = tm * C * 4
    hidden_tmp = 2 * tm * th * 4          # f32 (tm, th) intermediate + GELU temps
    return in_bytes + out_bytes + acc_bytes + hidden_tmp


def _choose_tiles(M, C, H, itemsize, vmem_budget=40 << 20):
    """Pick (tm, th): prefer the biggest M tile (weight-stream intensity) that
    still leaves >=2 tiles for large M (v7x megacore) and fits the VMEM budget;
    value th up to 512 to amortize the accumulator round trip."""
    if M >= 2048:
        tm_cands = (1024, 512, 256)
    elif M >= 1024:
        tm_cands = (512, 256)
    else:
        tm_cands = (256,)                 # never drop below 256 (256x256 MXU)
    th_cands = tuple(c for c in (1024, 512, 256, 128) if H % c == 0) or (H,)

    best = None
    for tm in tm_cands:
        for th in th_cands:
            if _vmem_bytes_estimate(tm, th, C, itemsize) <= vmem_budget:
                score = tm * min(th, 512)
                if best is None or score > best[0]:
                    best = (score, tm, th)
    if best is None:
        return tm_cands[-1], th_cands[-1]
    return best[1], best[2]


@functools.partial(jax.jit, static_argnames=("tm", "th", "approximate_gelu"))
def mlp_forward(x, w_fc, b_fc, w_proj, b_proj, *, tm=None, th=None,
                approximate_gelu=False):
    """x: (B, T, C). Weights stored (in_features, out_features); biases (1, out)."""
    B, T, C = x.shape
    H = w_fc.shape[1]          # 4 * C
    M = B * T
    x2d = x.reshape(M, C)

    itemsize = jnp.dtype(x.dtype).itemsize
    auto_tm, auto_th = _choose_tiles(M, C, H, itemsize)
    if tm is None:
        tm = auto_tm
    if th is None:
        th = auto_th

    # Pad ragged M so any B*T is supported; padded rows are sliced off afterwards.
    M_pad = pl.cdiv(M, tm) * tm
    if M_pad != M:
        x2d = jnp.pad(x2d, ((0, M_pad - M), (0, 0)))

    num_m_tiles = M_pad // tm
    grid = (num_m_tiles, H // th)   # reduction (H) axis last, by convention

    w_itemsize = jnp.dtype(w_fc.dtype).itemsize
    cost = pl.CostEstimate(
        flops=4 * M_pad * C * H,                   # two matmuls
        transcendentals=M_pad * H,                 # erf / tanh
        bytes_accessed=(
            (x2d.size + M_pad * C) * itemsize
            # Weights are re-streamed once per M tile (the true HBM traffic).
            + num_m_tiles * (w_fc.size + b_fc.size + w_proj.size + b_proj.size)
            * w_itemsize),
    )

    vmem_limit = max(32 << 20,
                     min(int(1.5 * _vmem_bytes_estimate(tm, th, C, itemsize))
                         + (2 << 20), 64 << 20))

    kernel = functools.partial(_mlp_kernel, approximate_gelu=approximate_gelu)

    out2d = pl.pallas_call(
        kernel,
        out_shape=jax.ShapeDtypeStruct((M_pad, C), x.dtype),
        grid_spec=pltpu.PrefetchScalarGridSpec(
            num_scalar_prefetch=0,
            grid=grid,
            in_specs=[
                pl.BlockSpec((tm, C), lambda i, h: (i, 0)),   # x tile (resident over H)
                pl.BlockSpec((C, th), lambda i, h: (0, h)),   # W_fc slice (streams over H)
                pl.BlockSpec((1, th), lambda i, h: (0, h)),   # b_fc slice
                pl.BlockSpec((th, C), lambda i, h: (h, 0)),   # W_proj slice (streams over H)
                pl.BlockSpec((1, C), lambda i, h: (0, 0)),    # b_proj (resident)
            ],
            out_specs=pl.BlockSpec((tm, C), lambda i, h: (i, 0)),
            scratch_shapes=[pltpu.VMEM((tm, C), jnp.float32)],
        ),
        compiler_params=pltpu.CompilerParams(
            dimension_semantics=("parallel", "arbitrary"),
            vmem_limit_bytes=vmem_limit,
        ),
        cost_estimate=cost,
    )(x2d, w_fc, b_fc, w_proj, b_proj)

    return out2d[:M].reshape(B, T, C)


def init_mlp_params(key, n_embd, dtype=jnp.float32):
    """Deterministic init mirroring nn.Linear defaults (uniform +/- 1/sqrt(fan_in)).
    Weights are stored (in_features, out_features) = transpose of torch layout."""
    k1, k2, k3, k4 = jax.random.split(key, 4)
    hidden = 4 * n_embd
    bound_fc = 1.0 / math.sqrt(n_embd)
    bound_proj = 1.0 / math.sqrt(hidden)
    w_fc = jax.random.uniform(k1, (n_embd, hidden), dtype, -bound_fc, bound_fc)
    b_fc = jax.random.uniform(k2, (1, hidden), dtype, -bound_fc, bound_fc)
    w_proj = jax.random.uniform(k3, (hidden, n_embd), dtype, -bound_proj, bound_proj)
    b_proj = jax.random.uniform(k4, (1, n_embd), dtype, -bound_proj, bound_proj)
    return w_fc, b_fc, w_proj, b_proj


def _reference_mlp(x2d, w_fc, b_fc, w_proj, b_proj, approximate=False):
    h = x2d.astype(jnp.float32) @ w_fc.astype(jnp.float32) + b_fc.astype(jnp.float32)
    if approximate:
        h = jax.nn.gelu(h, approximate=True)
    else:
        h = 0.5 * h * (1.0 + jax.lax.erf(h * _SQRT_HALF))
    return h @ w_proj.astype(jnp.float32) + b_proj.astype(jnp.float32)


if __name__ == "__main__":
    # Small GPT-2-style config: batch=2, seq=8, n_embd=32 (hidden = 128).
    B, T, C = 2, 8, 32
    key = jax.random.PRNGKey(0)
    kx, kp = jax.random.split(key)

    x = jax.random.normal(kx, (B, T, C), jnp.float32)
    w_fc, b_fc, w_proj, b_proj = init_mlp_params(kp, C)

    # 1) Default path: exact-erf GELU, f32 -- matches torch.nn.GELU() semantics.
    out = mlp_forward(x, w_fc, b_fc, w_proj, b_proj)
    out = jax.block_until_ready(out)

    ref = _reference_mlp(x.reshape(-1, C), w_fc, b_fc, w_proj, b_proj)
    ref = ref.astype(x.dtype).reshape(B, T, C)
    assert out.shape == (B, T, C)
    assert jnp.allclose(out, ref, atol=1e-4, rtol=1e-4)

    # 2) Perf path (v6e/v7x recommendation): bf16 operands + tanh-approx GELU.
    xb = x.astype(jnp.bfloat16)
    wb = tuple(p.astype(jnp.bfloat16) for p in (w_fc, b_fc, w_proj, b_proj))
    out_bf = mlp_forward(xb, *wb, approximate_gelu=True)
    out_bf = jax.block_until_ready(out_bf)
    ref_bf = _reference_mlp(x.reshape(-1, C), w_fc, b_fc, w_proj, b_proj,
                            approximate=True).reshape(B, T, C)
    assert out_bf.shape == (B, T, C)
    assert bool(jnp.all(jnp.isfinite(out_bf.astype(jnp.float32))))
    assert float(jnp.max(jnp.abs(out_bf.astype(jnp.float32) - ref_bf))) < 0.1

    print("KERNEL_OK")
</pallas_src>

<mosaic_0001>
module attributes {stable_mosaic.version = 11 : i64} {
  func.func @_mlp_kernel(%arg0: i32, %arg1: i32, %arg2: memref<256x32xf32, #tpu.memory_space<vmem>>, %arg3: memref<32x128xf32, #tpu.memory_space<vmem>>, %arg4: memref<1x128xf32, #tpu.memory_space<vmem>>, %arg5: memref<128x32xf32, #tpu.memory_space<vmem>>, %arg6: memref<1x32xf32, #tpu.memory_space<vmem>>, %arg7: memref<256x32xf32, #tpu.memory_space<vmem>>, %arg8: memref<256x32xf32, #tpu.memory_space<vmem>>) attributes {dimension_semantics = [#tpu.dimension_semantics<parallel>, #tpu.dimension_semantics<arbitrary>], iteration_bounds = array<i64: 1, 1>, scalar_prefetch = 0 : i64, scratch_operands = 1 : i64, tpu.core_type = #tpu.core_type<tc>, window_params = [{transform_indices = @transform_0, window_bounds = array<i64: 256, 32>}, {transform_indices = @transform_1, window_bounds = array<i64: 32, 128>}, {transform_indices = @transform_2, window_bounds = array<i64: 1, 128>}, {transform_indices = @transform_3, window_bounds = array<i64: 128, 32>}, {pipeline_mode = #tpu.pipeline_mode<synchronous>, transform_indices = @transform_4, window_bounds = array<i64: 1, 32>}, {transform_indices = @transform_5, window_bounds = array<i64: 256, 32>}]} {
    %c0_i32 = arith.constant 0 : i32
    %0 = arith.cmpi eq, %arg1, %c0_i32 : i32
    %1 = arith.extui %0 : i1 to i32
    %c0_i32_0 = arith.constant 0 : i32
    %2 = arith.cmpi ne, %1, %c0_i32_0 : i32
    scf.if %2 {
      %cst_18 = arith.constant 0.000000e+00 : f32
      %25 = vector.broadcast %cst_18 : f32 to vector<256x32xf32>
      %c0_19 = arith.constant 0 : index
      %c0_20 = arith.constant 0 : index
      %26 = vector.load %arg8[%c0_19, %c0_20] : memref<256x32xf32, #tpu.memory_space<vmem>>, vector<256x32xf32>
      tpu.vector_store %arg8[%c0_19, %c0_20], %25 {strides = array<i32>} : memref<256x32xf32, #tpu.memory_space<vmem>>, vector<256x32xf32>,
    } else {
    }
    %c0 = arith.constant 0 : index
    %c0_1 = arith.constant 0 : index
    %3 = vector.load %arg2[%c0, %c0_1] : memref<256x32xf32, #tpu.memory_space<vmem>>, vector<256x32xf32>
    %c0_2 = arith.constant 0 : index
    %c0_3 = arith.constant 0 : index
    %4 = vector.load %arg3[%c0_2, %c0_3] : memref<32x128xf32, #tpu.memory_space<vmem>>, vector<32x128xf32>
    %cst = arith.constant dense<0.000000e+00> : vector<256x128xf32>
    %5 = tpu.matmul %3, %4, %cst {dimension_numbers = #tpu.dot_dimension_numbers<[1], [0], [0], [1], [0, 0, 1, 1], [], []>} : vector<256x32xf32>, vector<32x128xf32>, vector<256x128xf32> -> vector<256x128xf32>
    %c0_4 = arith.constant 0 : index
    %c0_5 = arith.constant 0 : index
    %6 = vector.load %arg4[%c0_4, %c0_5] : memref<1x128xf32, #tpu.memory_space<vmem>>, vector<1x128xf32>
    %7 = vector.broadcast %6 : vector<1x128xf32> to vector<256x128xf32>
    %8 = arith.addf %5, %7 : vector<256x128xf32>
    %cst_6 = arith.constant 5.000000e-01 : f32
    %9 = vector.broadcast %cst_6 : f32 to vector<256x128xf32>
    %10 = arith.mulf %9, %8 : vector<256x128xf32>
    %cst_7 = arith.constant 0.707106769 : f32
    %11 = vector.broadcast %cst_7 : f32 to vector<256x128xf32>
    %12 = arith.mulf %8, %11 : vector<256x128xf32>
    %13 = math.erf %12 : vector<256x128xf32>
    %cst_8 = arith.constant 1.000000e+00 : f32
    %14 = vector.broadcast %cst_8 : f32 to vector<256x128xf32>
    %15 = arith.addf %14, %13 : vector<256x128xf32>
    %16 = arith.mulf %10, %15 : vector<256x128xf32>
    %c0_9 = arith.constant 0 : index
    %c0_10 = arith.constant 0 : index
    %17 = vector.load %arg8[%c0_9, %c0_10] : memref<256x32xf32, #tpu.memory_space<vmem>>, vector<256x32xf32>
    %c0_11 = arith.constant 0 : index
    %c0_12 = arith.constant 0 : index
    %18 = vector.load %arg5[%c0_11, %c0_12] : memref<128x32xf32, #tpu.memory_space<vmem>>, vector<128x32xf32>
    %cst_13 = arith.constant dense<0.000000e+00> : vector<256x32xf32>
    %19 = tpu.matmul %16, %18, %cst_13 {dimension_numbers = #tpu.dot_dimension_numbers<[1], [0], [0], [1], [0, 0, 1, 1], [], []>} : vector<256x128xf32>, vector<128x32xf32>, vector<256x32xf32> -> vector<256x32xf32>
    %20 = arith.addf %17, %19 : vector<256x32xf32>
    %c0_14 = arith.constant 0 : index
    %c0_15 = arith.constant 0 : index
    %21 = vector.load %arg8[%c0_14, %c0_15] : memref<256x32xf32, #tpu.memory_space<vmem>>, vector<256x32xf32>
    tpu.vector_store %arg8[%c0_14, %c0_15], %20 {strides = array<i32>} : memref<256x32xf32, #tpu.memory_space<vmem>>, vector<256x32xf32>,
    %c0_i32_16 = arith.constant 0 : i32
    %22 = arith.cmpi eq, %arg1, %c0_i32_16 : i32
    %23 = arith.extui %22 : i1 to i32
    %c0_i32_17 = arith.constant 0 : i32
    %24 = arith.cmpi ne, %23, %c0_i32_17 : i32
    scf.if %24 {
      %c0_18 = arith.constant 0 : index
      %c0_19 = arith.constant 0 : index
      %25 = vector.load %arg8[%c0_18, %c0_19] : memref<256x32xf32, #tpu.memory_space<vmem>>, vector<256x32xf32>
      %c0_20 = arith.constant 0 : index
      %c0_21 = arith.constant 0 : index
      %26 = vector.load %arg6[%c0_20, %c0_21] : memref<1x32xf32, #tpu.memory_space<vmem>>, vector<1x32xf32>
      %27 = vector.broadcast %26 : vector<1x32xf32> to vector<256x32xf32>
      %28 = arith.addf %25, %27 : vector<256x32xf32>
      %c0_22 = arith.constant 0 : index
      %c0_23 = arith.constant 0 : index
      %29 = vector.load %arg7[%c0_22, %c0_23] : memref<256x32xf32, #tpu.memory_space<vmem>>, vector<256x32xf32>
      tpu.vector_store %arg7[%c0_22, %c0_23], %28 {strides = array<i32>} : memref<256x32xf32, #tpu.memory_space<vmem>>, vector<256x32xf32>,
    } else {
    }
    return
  }
  func.func @transform_0(%arg0: i32, %arg1: i32) -> (i32, i32) {
    %c0_i32 = arith.constant 0 : i32
    %c0_i32_0 = arith.constant 0 : i32
    return %arg0, %c0_i32 : i32, i32
  }
  func.func @transform_1(%arg0: i32, %arg1: i32) -> (i32, i32) {
    %c0_i32 = arith.constant 0 : i32
    %c0_i32_0 = arith.constant 0 : i32
    return %c0_i32, %arg1 : i32, i32
  }
  func.func @transform_2(%arg0: i32, %arg1: i32) -> (i32, i32) {
    %c0_i32 = arith.constant 0 : i32
    %c0_i32_0 = arith.constant 0 : i32
    return %c0_i32, %arg1 : i32, i32
  }
  func.func @transform_3(%arg0: i32, %arg1: i32) -> (i32, i32) {
    %c0_i32 = arith.constant 0 : i32
    %c0_i32_0 = arith.constant 0 : i32
    return %arg1, %c0_i32 : i32, i32
  }
  func.func @transform_4(%arg0: i32, %arg1: i32) -> (i32, i32) {
    %c0_i32 = arith.constant 0 : i32
    %c0_i32_0 = arith.constant 0 : i32
    %c0_i32_1 = arith.constant 0 : i32
    return %c0_i32, %c0_i32_0 : i32, i32
  }
  func.func @transform_5(%arg0: i32, %arg1: i32) -> (i32, i32) {
    %c0_i32 = arith.constant 0 : i32
    %c0_i32_0 = arith.constant 0 : i32
    return %arg0, %c0_i32 : i32, i32
  }
}

</mosaic_0001>

<llo_original>
// kernel: mlp_forward.1
$region0: #{mlp_forward.1}
  #allocation0 [shape = 'u32[]', space=smem, size = 0x4, offset = 0x4, fixed_abs, tag = 'smem constant byte address 0x4 - core index']
  #allocation1 [shape = 'u32[72,128]{1,0:T(1,128)}', space=vmem, size = 0x9000, scoped, tag = 'internal scratch']
  #allocation2 [shape = 'f32[256,32]{1,0:T(8,128)}', space=vmem, size = 0x20000, scoped, tag = 'scratch operand']
  %s0 = inlined_call_operand.vmem [shape: f32[256,32], index: 0, kind: input, shape index: {}]
  %s1 = inlined_call_operand.vmem [shape: f32[32,128], index: 1, kind: input, shape index: {}]
  %s2 = inlined_call_operand.vmem [shape: f32[1,128], index: 2, kind: input, shape index: {}]
  %s3 = inlined_call_operand.vmem [shape: f32[128,32], index: 3, kind: input, shape index: {}]
  %s4 = inlined_call_operand.vmem [shape: f32[1,32], index: 4, kind: input, shape index: {}]
  %s5 = inlined_call_operand.vmem [shape: f32[256,32], index: 5, kind: output, shape index: {}]
  %s6 = sld [smem:[#allocation0]]
  $region38: #{mlp_forward.1} parent=0
    _
  %s8 = ssub.s32 1, %s6
  %s9 = scalar_select 0, %s8, %s6
  // Predicated region
  $region2: #{mlp_forward.1} parent=0 // pred_check
    _
  $region3: #{mlp_forward.1} parent=0 // pred_check_branch
    %11 = sbr.rel (0) target = $region5
  $region4: #{mlp_forward.1} parent=0 // pred_region
    _
  $region5: #{mlp_forward.1} parent=0 // pred_fallthru
    _
  // Predicated region
  $region6: #{mlp_forward.1} parent=0 // pred_check
    _
  $region7: #{mlp_forward.1} parent=0 // pred_check_branch
    %13 = sbr.rel (0) target = $region9
  $region8: #{mlp_forward.1} parent=0 // pred_region
    _
  $region9: #{mlp_forward.1} parent=0 // pred_fallthru
    _
  // Predicated region
  $region10: #{mlp_forward.1} parent=0 // pred_check
    _
  $region11: #{mlp_forward.1} parent=0 // pred_check_branch
    %15 = sbr.rel (0) target = $region13
  $region12: #{mlp_forward.1} parent=0 // pred_region
    _
  $region13: #{mlp_forward.1} parent=0 // pred_fallthru
    _
  // Predicated region
  $region14: #{mlp_forward.1} parent=0 // pred_check
    _
  $region15: #{mlp_forward.1} parent=0 // pred_check_branch
    %17 = sbr.rel (0) target = $region17
  $region16: #{mlp_forward.1} parent=0 // pred_region
    _
  $region17: #{mlp_forward.1} parent=0 // pred_fallthru
    _
  // Predicated region
  $region18: #{mlp_forward.1} parent=0 // pred_check
    _
  $region19: #{mlp_forward.1} parent=0 // pred_check_branch
    %19 = sbr.rel (0) target = $region21
  $region20: #{mlp_forward.1} parent=0 // pred_region
    _
  $region21: #{mlp_forward.1} parent=0 // pred_fallthru
    _
  %p20 = scmp.eq.s32.totalorder 0, 0
  // Predicated region
  $region22: #{mlp_forward.1} parent=0 // pred_check
    %p21 = pneg %p20
  $region23: #{mlp_forward.1} parent=0 // pred_check_branch
    %23 = sbr.rel (%p21) target = $region25
  $region24: #{mlp_forward.1} parent=0 // pred_region
    %vm24 = vcmask 261120
    %25 = vst.msk [vmem:[#allocation2] sm:$0xff] %vm24, 0.0
    %26 = vst.msk [vmem:[#allocation2 + $0x8] sm:$0xff] %vm24, 0.0
    %27 = vst.msk [vmem:[#allocation2 + $0x10] sm:$0xff] %vm24, 0.0
    %28 = vst.msk [vmem:[#allocation2 + $0x18] sm:$0xff] %vm24, 0.0
    %29 = vst.msk [vmem:[#allocation2 + $0x20] sm:$0xff] %vm24, 0.0
    %30 = vst.msk [vmem:[#allocation2 + $0x28] sm:$0xff] %vm24, 0.0
    %31 = vst.msk [vmem:[#allocation2 + $0x30] sm:$0xff] %vm24, 0.0
    %32 = vst.msk [vmem:[#allocation2 + $0x38] sm:$0xff] %vm24, 0.0
    %33 = vst.msk [vmem:[#allocation2 + $0x40] sm:$0xff] %vm24, 0.0
    %34 = vst.msk [vmem:[#allocation2 + $0x48] sm:$0xff] %vm24, 0.0
    %35 = vst.msk [vmem:[#allocation2 + $0x50] sm:$0xff] %vm24, 0.0
    %36 = vst.msk [vmem:[#allocation2 + $0x58] sm:$0xff] %vm24, 0.0
    %37 = vst.msk [vmem:[#allocation2 + $0x60] sm:$0xff] %vm24, 0.0
    %38 = vst.msk [vmem:[#allocation2 + $0x68] sm:$0xff] %vm24, 0.0
    %39 = vst.msk [vmem:[#allocation2 + $0x70] sm:$0xff] %vm24, 0.0
    %40 = vst.msk [vmem:[#allocation2 + $0x78] sm:$0xff] %vm24, 0.0
    %41 = vst.msk [vmem:[#allocation2 + $0x80] sm:$0xff] %vm24, 0.0
    %42 = vst.msk [vmem:[#allocation2 + $0x88] sm:$0xff] %vm24, 0.0
    %43 = vst.msk [vmem:[#allocation2 + $0x90] sm:$0xff] %vm24, 0.0
    %44 = vst.msk [vmem:[#allocation2 + $0x98] sm:$0xff] %vm24, 0.0
    %45 = vst.msk [vmem:[#allocation2 + $0xa0] sm:$0xff] %vm24, 0.0
    %46 = vst.msk [vmem:[#allocation2 + $0xa8] sm:$0xff] %vm24, 0.0
    %47 = vst.msk [vmem:[#allocation2 + $0xb0] sm:$0xff] %vm24, 0.0
    %48 = vst.msk [vmem:[#allocation2 + $0xb8] sm:$0xff] %vm24, 0.0
    %49 = vst.msk [vmem:[#allocation2 + $0xc0] sm:$0xff] %vm24, 0.0
    %50 = vst.msk [vmem:[#allocation2 + $0xc8] sm:$0xff] %vm24, 0.0
    %51 = vst.msk [vmem:[#allocation2 + $0xd0] sm:$0xff] %vm24, 0.0
    %52 = vst.msk [vmem:[#allocation2 + $0xd8] sm:$0xff] %vm24, 0.0
    %53 = vst.msk [vmem:[#allocation2 + $0xe0] sm:$0xff] %vm24, 0.0
    %54 = vst.msk [vmem:[#allocation2 + $0xe8] sm:$0xff] %vm24, 0.0
    %55 = vst.msk [vmem:[#allocation2 + $0xf0] sm:$0xff] %vm24, 0.0
    %56 = vst.msk [vmem:[#allocation2 + $0xf8] sm:$0xff] %vm24, 0.0
  $region25: #{mlp_forward.1} parent=0 // pred_fallthru
    _
  %v57 = vld [vmem:[%s0] sm:$0xff]
  %v58 = vld [vmem:[%s0 + $0x8] sm:$0xff]
  %v59 = vld [vmem:[%s0 + $0x10] sm:$0xff]
  %v60 = vld [vmem:[%s0 + $0x18] sm:$0xff]
  %v61 = vld [vmem:[%s0 + $0x20] sm:$0xff]
  %v62 = vld [vmem:[%s0 + $0x28] sm:$0xff]
  %v63 = vld [vmem:[%s0 + $0x30] sm:$0xff]
  %v64 = vld [vmem:[%s0 + $0x38] sm:$0xff]
  %v65 = vld [vmem:[%s0 + $0x40] sm:$0xff]
  %v66 = vld [vmem:[%s0 + $0x48] sm:$0xff]
  %v67 = vld [vmem:[%s0 + $0x50] sm:$0xff]
  %v68 = vld [vmem:[%s0 + $0x58] sm:$0xff]
  %v69 = vld [vmem:[%s0 + $0x60] sm:$0xff]
  %v70 = vld [vmem:[%s0 + $0x68] sm:$0xff]
  %v71 = vld [vmem:[%s0 + $0x70] sm:$0xff]
  %v72 = vld [vmem:[%s0 + $0x78] sm:$0xff]
  %v73 = vld [vmem:[%s0 + $0x80] sm:$0xff]
  %v74 = vld [vmem:[%s0 + $0x88] sm:$0xff]
  %v75 = vld [vmem:[%s0 + $0x90] sm:$0xff]
  %v76 = vld [vmem:[%s0 + $0x98] sm:$0xff]
  %v77 = vld [vmem:[%s0 + $0xa0] sm:$0xff]
  %v78 = vld [vmem:[%s0 + $0xa8] sm:$0xff]
  %v79 = vld [vmem:[%s0 + $0xb0] sm:$0xff]
  %v80 = vld [vmem:[%s0 + $0xb8] sm:$0xff]
  %v81 = vld [vmem:[%s0 + $0xc0] sm:$0xff]
  %v82 = vld [vmem:[%s0 + $0xc8] sm:$0xff]
  %v83 = vld [vmem:[%s0 + $0xd0] sm:$0xff]
  %v84 = vld [vmem:[%s0 + $0xd8] sm:$0xff]
  %v85 = vld [vmem:[%s0 + $0xe0] sm:$0xff]
  %v86 = vld [vmem:[%s0 + $0xe8] sm:$0xff]
  %v87 = vld [vmem:[%s0 + $0xf0] sm:$0xff]
  %v88 = vld [vmem:[%s0 + $0xf8] sm:$0xff]
  %v89 = vld [vmem:[%s1] sm:$0xff]
  %v90 = vld [vmem:[%s1 + $0x8] sm:$0xff]
  %v91 = vld [vmem:[%s1 + $0x10] sm:$0xff]
  %v92 = vld [vmem:[%s1 + $0x18] sm:$0xff]
  %v93 = vld [vmem:[%s2] sm:$0x1]
  %v95 = vperm.slane %v93, 0
  %vm97 = vcmask 261120
  %v99 = vsel %vm97, %v57, 0
  %v102 = vsel %vm97, %v58, 0
  %v105 = vsel %vm97, %v59, 0
  %v108 = vsel %vm97, %v60, 0
  %v111 = vsel %vm97, %v61, 0
  %v114 = vsel %vm97, %v62, 0
  %v117 = vsel %vm97, %v63, 0
  %v120 = vsel %vm97, %v64, 0
  %v123 = vsel %vm97, %v65, 0
  %v126 = vsel %vm97, %v66, 0
  %v129 = vsel %vm97, %v67, 0
  %v132 = vsel %vm97, %v68, 0
  %v135 = vsel %vm97, %v69, 0
  %v138 = vsel %vm97, %v70, 0
  %v141 = vsel %vm97, %v71, 0
  %v144 = vsel %vm97, %v72, 0
  %v147 = vsel %vm97, %v73, 0
  %v150 = vsel %vm97, %v74, 0
  %v153 = vsel %vm97, %v75, 0
  %v156 = vsel %vm97, %v76, 0
  %v159 = vsel %vm97, %v77, 0
  %v162 = vsel %vm97, %v78, 0
  %v165 = vsel %vm97, %v79, 0
  %v168 = vsel %vm97, %v80, 0
  %v171 = vsel %vm97, %v81, 0
  %v174 = vsel %vm97, %v82, 0
  %v177 = vsel %vm97, %v83, 0
  %v180 = vsel %vm97, %v84, 0
  %v183 = vsel %vm97, %v85, 0
  %v186 = vsel %vm97, %v86, 0
  %v189 = vsel %vm97, %v87, 0
  %v192 = vsel %vm97, %v88, 0
  %194 = vmatpush.msra.mxu0 0.0
  %195 = vmatpush.msra.mxu0 0.0
  %196 = vmatpush.msra.mxu0 0.0
  %197 = vmatpush.msra.mxu0 0.0
  %198 = vmatpush.msra.mxu0 0.0
  %199 = vmatpush.msra.mxu0 0.0
  %200 = vmatpush.msra.mxu0 0.0
  %201 = vmatpush.msra.mxu0 0.0
  %202 = vmatpush.msra.mxu0 0.0
  %203 = vmatpush.msra.mxu0 0.0
  %204 = vmatpush.msra.mxu0 0.0
  %205 = vmatpush.msra.mxu0 0.0
  %206 = vmatpush.msra.mxu0 %v92
  %207 = vmatpush.msra.mxu0 %v91
  %208 = vmatpush.msra.mxu0 %v90
  %209 = vmatpush.msra.mxu0 %v89
  %210 = vmatmul.f32.gmra.mxu0 %v99
  %v211 = vpop.f32.mrf.mxu0
  %v212 = vadd.f32 %v95, %v211
  %213 = vmatmul.f32.gmra.mxu0 %v102
  %v214 = vpop.f32.mrf.mxu0
  %v215 = vadd.f32 %v95, %v214
  %216 = vmatmul.f32.gmra.mxu0 %v105
  %v217 = vpop.f32.mrf.mxu0
  %v218 = vadd.f32 %v95, %v217
  %219 = vmatmul.f32.gmra.mxu0 %v108
  %v220 = vpop.f32.mrf.mxu0
  %v221 = vadd.f32 %v95, %v220
  %222 = vmatmul.f32.gmra.mxu0 %v111
  %v223 = vpop.f32.mrf.mxu0
  %v224 = vadd.f32 %v95, %v223
  %225 = vmatmul.f32.gmra.mxu0 %v114
  %v226 = vpop.f32.mrf.mxu0
  %v227 = vadd.f32 %v95, %v226
  %228 = vmatmul.f32.gmra.mxu0 %v117
  %v229 = vpop.f32.mrf.mxu0
  %v230 = vadd.f32 %v95, %v229
  %231 = vmatmul.f32.gmra.mxu0 %v120
  %v232 = vpop.f32.mrf.mxu0
  %v233 = vadd.f32 %v95, %v232
  %234 = vmatmul.f32.gmra.mxu0 %v123
  %v235 = vpop.f32.mrf.mxu0
  %v236 = vadd.f32 %v95, %v235
  %237 = vmatmul.f32.gmra.mxu0 %v126
  %v238 = vpop.f32.mrf.mxu0
  %v239 = vadd.f32 %v95, %v238
  %240 = vmatmul.f32.gmra.mxu0 %v129
  %v241 = vpop.f32.mrf.mxu0
  %v242 = vadd.f32 %v95, %v241
  %243 = vmatmul.f32.gmra.mxu0 %v132
  %v244 = vpop.f32.mrf.mxu0
  %v245 = vadd.f32 %v95, %v244
  %246 = vmatmul.f32.gmra.mxu0 %v135
  %v247 = vpop.f32.mrf.mxu0
  %v248 = vadd.f32 %v95, %v247
  %249 = vmatmul.f32.gmra.mxu0 %v138
  %v250 = vpop.f32.mrf.mxu0
  %v251 = vadd.f32 %v95, %v250
  %252 = vmatmul.f32.gmra.mxu0 %v141
  %v253 = vpop.f32.mrf.mxu0
  %v254 = vadd.f32 %v95, %v253
  %255 = vmatmul.f32.gmra.mxu0 %v144
  %v256 = vpop.f32.mrf.mxu0
  %v257 = vadd.f32 %v95, %v256
  %258 = vmatmul.f32.gmra.mxu0 %v147
  %v259 = vpop.f32.mrf.mxu0
  %v260 = vadd.f32 %v95, %v259
  %261 = vmatmul.f32.gmra.mxu0 %v150
  %v262 = vpop.f32.mrf.mxu0
  %v263 = vadd.f32 %v95, %v262
  %264 = vmatmul.f32.gmra.mxu0 %v153
  %v265 = vpop.f32.mrf.mxu0
  %v266 = vadd.f32 %v95, %v265
  %267 = vmatmul.f32.gmra.mxu0 %v156
  %v268 = vpop.f32.mrf.mxu0
  %v269 = vadd.f32 %v95, %v268
  %270 = vmatmul.f32.gmra.mxu0 %v159
  %v271 = vpop.f32.mrf.mxu0
  %v272 = vadd.f32 %v95, %v271
  %273 = vmatmul.f32.gmra.mxu0 %v162
  %v274 = vpop.f32.mrf.mxu0
  %v275 = vadd.f32 %v95, %v274
  %276 = vmatmul.f32.gmra.mxu0 %v165
  %v277 = vpop.f32.mrf.mxu0
  %v278 = vadd.f32 %v95, %v277
  %279 = vmatmul.f32.gmra.mxu0 %v168
  %v280 = vpop.f32.mrf.mxu0
  %v281 = vadd.f32 %v95, %v280
  %282 = vmatmul.f32.gmra.mxu0 %v171
  %v283 = vpop.f32.mrf.mxu0
  %v284 = vadd.f32 %v95, %v283
  %285 = vmatmul.f32.gmra.mxu0 %v174
  %v286 = vpop.f32.mrf.mxu0
  %v287 = vadd.f32 %v95, %v286
  %288 = vmatmul.f32.gmra.mxu0 %v177
  %v289 = vpop.f32.mrf.mxu0
  %v290 = vadd.f32 %v95, %v289
  %291 = vmatmul.f32.gmra.mxu0 %v180
  %v292 = vpop.f32.mrf.mxu0
  %v293 = vadd.f32 %v95, %v292
  %294 = vmatmul.f32.gmra.mxu0 %v183
  %v295 = vpop.f32.mrf.mxu0
  %v296 = vadd.f32 %v95, %v295
  %297 = vmatmul.f32.gmra.mxu0 %v186
  %v298 = vpop.f32.mrf.mxu0
  %v299 = vadd.f32 %v95, %v298
  %300 = vmatmul.f32.gmra.mxu0 %v189
  %v301 = vpop.f32.mrf.mxu0
  %v302 = vadd.f32 %v95, %v301
  %303 = vmatmul.f32.gmra.mxu0 %v192
  %v304 = vpop.f32.mrf.mxu0
  %v305 = vadd.f32 %v95, %v304
  %306 = vdwg.mxu0
  %v307 = vmul.f32 %v212, 0.5
  %v308 = vmul.f32 %v215, 0.5
  %v309 = vmul.f32 %v218, 0.5
  %v310 = vmul.f32 %v221, 0.5
  %v311 = vmul.f32 %v224, 0.5
  %v312 = vmul.f32 %v227, 0.5
  %v313 = vmul.f32 %v230, 0.5
  %v314 = vmul.f32 %v233, 0.5
  %v315 = vmul.f32 %v236, 0.5
  %v316 = vmul.f32 %v239, 0.5
  %v317 = vmul.f32 %v242, 0.5
  %v318 = vmul.f32 %v245, 0.5
  %v319 = vmul.f32 %v248, 0.5
  %v320 = vmul.f32 %v251, 0.5
  %v321 = vmul.f32 %v254, 0.5
  %v322 = vmul.f32 %v257, 0.5
  %v323 = vmul.f32 %v260, 0.5
  %v324 = vmul.f32 %v263, 0.5
  %v325 = vmul.f32 %v266, 0.5
  %v326 = vmul.f32 %v269, 0.5
  %v327 = vmul.f32 %v272, 0.5
  %v328 = vmul.f32 %v275, 0.5
  %v329 = vmul.f32 %v278, 0.5
  %v330 = vmul.f32 %v281, 0.5
  %v331 = vmul.f32 %v284, 0.5
  %v332 = vmul.f32 %v287, 0.5
  %v333 = vmul.f32 %v290, 0.5
  %v334 = vmul.f32 %v293, 0.5
  %v335 = vmul.f32 %v296, 0.5
  %v336 = vmul.f32 %v299, 0.5
  %v337 = vmul.f32 %v302, 0.5
  %v338 = vmul.f32 %v305, 0.5
  %v339 = vmul.f32 %v212, 0.70710677
  %v340 = vmul.f32 %v215, 0.70710677
  %v341 = vmul.f32 %v218, 0.70710677
  %v342 = vmul.f32 %v221, 0.70710677
  %v343 = vmul.f32 %v224, 0.70710677
  %v344 = vmul.f32 %v227, 0.70710677
  %v345 = vmul.f32 %v230, 0.70710677
  %v346 = vmul.f32 %v233, 0.70710677
  %v347 = vmul.f32 %v236, 0.70710677
  %v348 = vmul.f32 %v239, 0.70710677
  %v349 = vmul.f32 %v242, 0.70710677
  %v350 = vmul.f32 %v245, 0.70710677
  %v351 = vmul.f32 %v248, 0.70710677
  %v352 = vmul.f32 %v251, 0.70710677
  %v353 = vmul.f32 %v254, 0.70710677
  %v354 = vmul.f32 %v257, 0.70710677
  %v355 = vmul.f32 %v260, 0.70710677
  %v356 = vmul.f32 %v263, 0.70710677
  %v357 = vmul.f32 %v266, 0.70710677
  %v358 = vmul.f32 %v269, 0.70710677
  %v359 = vmul.f32 %v272, 0.70710677
  %v360 = vmul.f32 %v275, 0.70710677
  %v361 = vmul.f32 %v278, 0.70710677
  %v362 = vmul.f32 %v281, 0.70710677
  %v363 = vmul.f32 %v284, 0.70710677
  %v364 = vmul.f32 %v287, 0.70710677
  %v365 = vmul.f32 %v290, 0.70710677
  %v366 = vmul.f32 %v293, 0.70710677
  %v367 = vmul.f32 %v296, 0.70710677
  %v368 = vmul.f32 %v299, 0.70710677
  %v369 = vmul.f32 %v302, 0.70710677
  %v370 = vmul.f32 %v305, 0.70710677
  %v371 = vmul.f32 %v339, %v339
  %v372 = vmin.f32 16.0, %v371
  %v373 = vmul.f32 %v372, 2.1237322e-06
  %v374 = vadd.f32 %v373, 0.00028619796
  %v375 = vmul.f32 %v372, %v374
  %v376 = vadd.f32 %v375, 0.0036580483
  %v377 = vmul.f32 %v372, %v376
  %v378 = vadd.f32 %v377, 0.05243302
  %v379 = vmul.f32 %v372, %v378
  %v380 = vadd.f32 %v379, 0.18741608
  %v381 = vmul.f32 %v372, %v380
  %v382 = vadd.f32 %v381, 1.1283791
  %v383 = vmul.f32 %v339, %v382
  %v384 = vmul.f32 %v372, 3.8918573e-05
  %v385 = vadd.f32 %v384, 0.001143296
  %v386 = vmul.f32 %v372, %v385
  %v387 = vadd.f32 %v386, 0.014752088
  %v388 = vmul.f32 %v372, %v387
  %v389 = vadd.f32 %v388, 0.112945676
  %v390 = vmul.f32 %v372, %v389
  %v391 = vadd.f32 %v390, 0.4994258
  %v392 = vmul.f32 %v372, %v391
  %v393 = vadd.f32 %v392, 1.0
  %v394 = vrcp.pop %v393
  %v395 = vmul.f32 %v393, %v394
  %v396 = vsub.f32 1.0, %v395
  %v397 = vmul.f32 %v394, %v396
  %v398 = vadd.f32 %v394, %v397
  %vm399 = vweird.f32 %v393
  %vm400 = vweird.f32 %v394
  %vm401 = vmor %vm399, %vm400
  %v402 = vsel %vm401, %v394, %v398
  %v403 = vand.u32 2147483647, %v393
  %vm404 = vcmp.eq.f32.partialorder %v403, 8.507059e+37
  %v405 = vand.u32 %v393, 2147483648
  %v406 = vor.u32 1.1754944e-38, %v405
  %v407 = vsel %vm404, %v406, %v402
  %v408 = vmul.f32 %v383, %v407
  %v409 = vmin.f32 %v408, 1.0
  %v410 = vmax.f32 %v409, -1.0
  %v411 = vmul.f32 %v340, %v340
  %v412 = vmin.f32 16.0, %v411
  %v413 = vmul.f32 %v412, 2.1237322e-06
  %v414 = vadd.f32 %v413, 0.00028619796
  %v415 = vmul.f32 %v412, %v414
  %v416 = vadd.f32 %v415, 0.0036580483
  %v417 = vmul.f32 %v412, %v416
  %v418 = vadd.f32 %v417, 0.05243302
  %v419 = vmul.f32 %v412, %v418
  %v420 = vadd.f32 %v419, 0.18741608
  %v421 = vmul.f32 %v412, %v420
  %v422 = vadd.f32 %v421, 1.1283791
  %v423 = vmul.f32 %v340, %v422
  %v424 = vmul.f32 %v412, 3.8918573e-05
  %v425 = vadd.f32 %v424, 0.001143296
  %v426 = vmul.f32 %v412, %v425
  %v427 = vadd.f32 %v426, 0.014752088
  %v428 = vmul.f32 %v412, %v427
  %v429 = vadd.f32 %v428, 0.112945676
  %v430 = vmul.f32 %v412, %v429
  %v431 = vadd.f32 %v430, 0.4994258
  %v432 = vmul.f32 %v412, %v431
  %v433 = vadd.f32 %v432, 1.0
  %v434 = vrcp.pop %v433
  %v435 = vmul.f32 %v433, %v434
  %v436 = vsub.f32 1.0, %v435
  %v437 = vmul.f32 %v434, %v436
  %v438 = vadd.f32 %v434, %v437
  %vm439 = vweird.f32 %v433
  %vm440 = vweird.f32 %v434
  %vm441 = vmor %vm439, %vm440
  %v442 = vsel %vm441, %v434, %v438
  %v443 = vand.u32 2147483647, %v433
  %vm444 = vcmp.eq.f32.partialorder %v443, 8.507059e+37
  %v445 = vand.u32 %v433, 2147483648
  %v446 = vor.u32 1.1754944e-38, %v445
  %v447 = vsel %vm444, %v446, %v442
  %v448 = vmul.f32 %v423, %v447
  %v449 = vmin.f32 %v448, 1.0
  %v450 = vmax.f32 %v449, -1.0
  %v451 = vmul.f32 %v341, %v341
  %v452 = vmin.f32 16.0, %v451
  %v453 = vmul.f32 %v452, 2.1237322e-06
  %v454 = vadd.f32 %v453, 0.00028619796
  %v455 = vmul.f32 %v452, %v454
  %v456 = vadd.f32 %v455, 0.0036580483
  %v457 = vmul.f32 %v452, %v456
  %v458 = vadd.f32 %v457, 0.05243302
  %v459 = vmul.f32 %v452, %v458
  %v460 = vadd.f32 %v459, 0.18741608
  %v461 = vmul.f32 %v452, %v460
  %v462 = vadd.f32 %v461, 1.1283791
  %v463 = vmul.f32 %v341, %v462
  %v464 = vmul.f32 %v452, 3.8918573e-05
  %v465 = vadd.f32 %v464, 0.001143296
  %v466 = vmul.f32 %v452, %v465
  %v467 = vadd.f32 %v466, 0.014752088
  %v468 = vmul.f32 %v452, %v467
  %v469 = vadd.f32 %v468, 0.112945676
  %v470 = vmul.f32 %v452, %v469
  %v471 = vadd.f32 %v470, 0.4994258
  %v472 = vmul.f32 %v452, %v471
  %v473 = vadd.f32 %v472, 1.0
  %v474 = vrcp.pop %v473
  %v475 = vmul.f32 %v473, %v474
  %v476 = vsub.f32 1.0, %v475
  %v477 = vmul.f32 %v474, %v476
  %v478 = vadd.f32 %v474, %v477
  %vm479 = vweird.f32 %v473
  %vm480 = vweird.f32 %v474
  %vm481 = vmor %vm479, %vm480
  %v482 = vsel %vm481, %v474, %v478
  %v483 = vand.u32 2147483647, %v473
  %vm484 = vcmp.eq.f32.partialorder %v483, 8.507059e+37
  %v485 = vand.u32 %v473, 2147483648
  %v486 = vor.u32 1.1754944e-38, %v485
  %v487 = vsel %vm484, %v486, %v482
  %v488 = vmul.f32 %v463, %v487
  %v489 = vmin.f32 %v488, 1.0
  %v490 = vmax.f32 %v489, -1.0
  %v491 = vmul.f32 %v342, %v342
  %v492 = vmin.f32 16.0, %v491
  %v493 = vmul.f32 %v492, 2.1237322e-06
  %v494 = vadd.f32 %v493, 0.00028619796
  %v495 = vmul.f32 %v492, %v494
  %v496 = vadd.f32 %v495, 0.0036580483
  %v497 = vmul.f32 %v492, %v496
  %v498 = vadd.f32 %v497, 0.05243302
  %v499 = vmul.f32 %v492, %v498
  %v500 = vadd.f32 %v499, 0.18741608
  %v501 = vmul.f32 %v492, %v500
  %v502 = vadd.f32 %v501, 1.1283791
  %v503 = vmul.f32 %v342, %v502
  %v504 = vmul.f32 %v492, 3.8918573e-05
  %v505 = vadd.f32 %v504, 0.001143296
  %v506 = vmul.f32 %v492, %v505
  %v507 = vadd.f32 %v506, 0.014752088
  %v508 = vmul.f32 %v492, %v507
  %v509 = vadd.f32 %v508, 0.112945676
  %v510 = vmul.f32 %v492, %v509
  %v511 = vadd.f32 %v510, 0.4994258
  %v512 = vmul.f32 %v492, %v511
  %v513 = vadd.f32 %v512, 1.0
  %v514 = vrcp.pop %v513
  %v515 = vmul.f32 %v513, %v514
  %v516 = vsub.f32 1.0, %v515
  %v517 = vmul.f32 %v514, %v516
  %v518 = vadd.f32 %v514, %v517
  %vm519 = vweird.f32 %v513
  %vm520 = vweird.f32 %v514
  %vm521 = vmor %vm519, %vm520
  %v522 = vsel %vm521, %v514, %v518
  %v523 = vand.u32 2147483647, %v513
  %vm524 = vcmp.eq.f32.partialorder %v523, 8.507059e+37
  %v525 = vand.u32 %v513, 2147483648
  %v526 = vor.u32 1.1754944e-38, %v525
  %v527 = vsel %vm524, %v526, %v522
  %v528 = vmul.f32 %v503, %v527
  %v529 = vmin.f32 %v528, 1.0
  %v530 = vmax.f32 %v529, -1.0
  %v531 = vmul.f32 %v343, %v343
  %v532 = vmin.f32 16.0, %v531
  %v533 = vmul.f32 %v532, 2.1237322e-06
  %v534 = vadd.f32 %v533, 0.00028619796
  %v535 = vmul.f32 %v532, %v534
  %v536 = vadd.f32 %v535, 0.0036580483
  %v537 = vmul.f32 %v532, %v536
  %v538 = vadd.f32 %v537, 0.05243302
  %v539 = vmul.f32 %v532, %v538
  %v540 = vadd.f32 %v539, 0.18741608
  %v541 = vmul.f32 %v532, %v540
  %v542 = vadd.f32 %v541, 1.1283791
  %v543 = vmul.f32 %v343, %v542
  %v544 = vmul.f32 %v532, 3.8918573e-05
  %v545 = vadd.f32 %v544, 0.001143296
  %v546 = vmul.f32 %v532, %v545
  %v547 = vadd.f32 %v546, 0.014752088
  %v548 = vmul.f32 %v532, %v547
  %v549 = vadd.f32 %v548, 0.112945676
  %v550 = vmul.f32 %v532, %v549
  %v551 = vadd.f32 %v550, 0.4994258
  %v552 = vmul.f32 %v532, %v551
  %v553 = vadd.f32 %v552, 1.0
  %v554 = vrcp.pop %v553
  %v555 = vmul.f32 %v553, %v554
  %v556 = vsub.f32 1.0, %v555
  %v557 = vmul.f32 %v554, %v556
  %v558 = vadd.f32 %v554, %v557
  %vm559 = vweird.f32 %v553
  %vm560 = vweird.f32 %v554
  %vm561 = vmor %vm559, %vm560
  %v562 = vsel %vm561, %v554, %v558
  %v563 = vand.u32 2147483647, %v553
  %vm564 = vcmp.eq.f32.partialorder %v563, 8.507059e+37
  %v565 = vand.u32 %v553, 2147483648
  %v566 = vor.u32 1.1754944e-38, %v565
  %v567 = vsel %vm564, %v566, %v562
  %v568 = vmul.f32 %v543, %v567
  %v569 = vmin.f32 %v568, 1.0
  %v570 = vmax.f32 %v569, -1.0
  %v571 = vmul.f32 %v344, %v344
  %v572 = vmin.f32 16.0, %v571
  %v573 = vmul.f32 %v572, 2.1237322e-06
  %v574 = vadd.f32 %v573, 0.00028619796
  %v575 = vmul.f32 %v572, %v574
  %v576 = vadd.f32 %v575, 0.0036580483
  %v577 = vmul.f32 %v572, %v576
  %v578 = vadd.f32 %v577, 0.05243302
  %v579 = vmul.f32 %v572, %v578
  %v580 = vadd.f32 %v579, 0.18741608
  %v581 = vmul.f32 %v572, %v580
  %v582 = vadd.f32 %v581, 1.1283791
  %v583 = vmul.f32 %v344, %v582
  %v584 = vmul.f32 %v572, 3.8918573e-05
  %v585 = vadd.f32 %v584, 0.001143296
  %v586 = vmul.f32 %v572, %v585
  %v587 = vadd.f32 %v586, 0.014752088
  %v588 = vmul.f32 %v572, %v587
  %v589 = vadd.f32 %v588, 0.112945676
  %v590 = vmul.f32 %v572, %v589
  %v591 = vadd.f32 %v590, 0.4994258
  %v592 = vmul.f32 %v572, %v591
  %v593 = vadd.f32 %v592, 1.0
  %v594 = vrcp.pop %v593
  %v595 = vmul.f32 %v593, %v594
  %v596 = vsub.f32 1.0, %v595
  %v597 = vmul.f32 %v594, %v596
  %v598 = vadd.f32 %v594, %v597
  %vm599 = vweird.f32 %v593
  %vm600 = vweird.f32 %v594
  %vm601 = vmor %vm599, %vm600
  %v602 = vsel %vm601, %v594, %v598
  %v603 = vand.u32 2147483647, %v593
  %vm604 = vcmp.eq.f32.partialorder %v603, 8.507059e+37
  %v605 = vand.u32 %v593, 2147483648
  %v606 = vor.u32 1.1754944e-38, %v605
  %v607 = vsel %vm604, %v606, %v602
  %v608 = vmul.f32 %v583, %v607
  %v609 = vmin.f32 %v608, 1.0
  %v610 = vmax.f32 %v609, -1.0
  %v611 = vmul.f32 %v345, %v345
  %v612 = vmin.f32 16.0, %v611
  %v613 = vmul.f32 %v612, 2.1237322e-06
  %v614 = vadd.f32 %v613, 0.00028619796
  %v615 = vmul.f32 %v612, %v614
  %v616 = vadd.f32 %v615, 0.0036580483
  %v617 = vmul.f32 %v612, %v616
  %v618 = vadd.f32 %v617, 0.05243302
  %v619 = vmul.f32 %v612, %v618
  %v620 = vadd.f32 %v619, 0.18741608
  %v621 = vmul.f32 %v612, %v620
  %v622 = vadd.f32 %v621, 1.1283791
  %v623 = vmul.f32 %v345, %v622
  %v624 = vmul.f32 %v612, 3.8918573e-05
  %v625 = vadd.f32 %v624, 0.001143296
  %v626 = vmul.f32 %v612, %v625
  %v627 = vadd.f32 %v626, 0.014752088
  %v628 = vmul.f32 %v612, %v627
  %v629 = vadd.f32 %v628, 0.112945676
  %v630 = vmul.f32 %v612, %v629
  %v631 = vadd.f32 %v630, 0.4994258
  %v632 = vmul.f32 %v612, %v631
  %v633 = vadd.f32 %v632, 1.0
  %v634 = vrcp.pop %v633
  %v635 = vmul.f32 %v633, %v634
  %v636 = vsub.f32 1.0, %v635
  %v637 = vmul.f32 %v634, %v636
  %v638 = vadd.f32 %v634, %v637
  %vm639 = vweird.f32 %v633
  %vm640 = vweird.f32 %v634
  %vm641 = vmor %vm639, %vm640
  %v642 = vsel %vm641, %v634, %v638
  %v643 = vand.u32 2147483647, %v633
  %vm644 = vcmp.eq.f32.partialorder %v643, 8.507059e+37
  %v645 = vand.u32 %v633, 2147483648
  %v646 = vor.u32 1.1754944e-38, %v645
  %v647 = vsel %vm644, %v646, %v642
  %v648 = vmul.f32 %v623, %v647
  %v649 = vmin.f32 %v648, 1.0
  %v650 = vmax.f32 %v649, -1.0
  %v651 = vmul.f32 %v346, %v346
  %v652 = vmin.f32 16.0, %v651
  %v653 = vmul.f32 %v652, 2.1237322e-06
  %v654 = vadd.f32 %v653, 0.00028619796
  %v655 = vmul.f32 %v652, %v654
  %v656 = vadd.f32 %v655, 0.0036580483
  %v657 = vmul.f32 %v652, %v656
  %v658 = vadd.f32 %v657, 0.05243302
  %v659 = vmul.f32 %v652, %v658
  %v660 = vadd.f32 %v659, 0.18741608
  %v661 = vmul.f32 %v652, %v660
  %v662 = vadd.f32 %v661, 1.1283791
  %v663 = vmul.f32 %v346, %v662
  %v664 = vmul.f32 %v652, 3.8918573e-05
  %v665 = vadd.f32 %v664, 0.001143296
  %v666 = vmul.f32 %v652, %v665
  %v667 = vadd.f32 %v666, 0.014752088
  %v668 = vmul.f32 %v652, %v667
  %v669 = vadd.f32 %v668, 0.112945676
  %v670 = vmul.f32 %v652, %v669
  %v671 = vadd.f32 %v670, 0.4994258
  %v672 = vmul.f32 %v652, %v671
  %v673 = vadd.f32 %v672, 1.0
  %v674 = vrcp.pop %v673
  %v675 = vmul.f32 %v673, %v674
  %v676 = vsub.f32 1.0, %v675
  %v677 = vmul.f32 %v674, %v676
  %v678 = vadd.f32 %v674, %v677
  %vm679 = vweird.f32 %v673
  %vm680 = vweird.f32 %v674
  %vm681 = vmor %vm679, %vm680
  %v682 = vsel %vm681, %v674, %v678
  %v683 = vand.u32 2147483647, %v673
  %vm684 = vcmp.eq.f32.partialorder %v683, 8.507059e+37
  %v685 = vand.u32 %v673, 2147483648
  %v686 = vor.u32 1.1754944e-38, %v685
  %v687 = vsel %vm684, %v686, %v682
  %v688 = vmul.f32 %v663, %v687
  %v689 = vmin.f32 %v688, 1.0
  %v690 = vmax.f32 %v689, -1.0
  %v691 = vmul.f32 %v347, %v347
  %v692 = vmin.f32 16.0, %v691
  %v693 = vmul.f32 %v692, 2.1237322e-06
  %v694 = vadd.f32 %v693, 0.00028619796
  %v695 = vmul.f32 %v692, %v694
  %v696 = vadd.f32 %v695, 0.0036580483
  %v697 = vmul.f32 %v692, %v696
  %v698 = vadd.f32 %v697, 0.05243302
  %v699 = vmul.f32 %v692, %v698
  %v700 = vadd.f32 %v699, 0.18741608
  %v701 = vmul.f32 %v692, %v700
  %v702 = vadd.f32 %v701, 1.1283791
  %v703 = vmul.f32 %v347, %v702
  %v704 = vmul.f32 %v692, 3.8918573e-05
  %v705 = vadd.f32 %v704, 0.001143296
  %v706 = vmul.f32 %v692, %v705
  %v707 = vadd.f32 %v706, 0.014752088
  %v708 = vmul.f32 %v692, %v707
  %v709 = vadd.f32 %v708, 0.112945676
  %v710 = vmul.f32 %v692, %v709
  %v711 = vadd.f32 %v710, 0.4994258
  %v712 = vmul.f32 %v692, %v711
  %v713 = vadd.f32 %v712, 1.0
  %v714 = vrcp.pop %v713
  %v715 = vmul.f32 %v713, %v714
  %v716 = vsub.f32 1.0, %v715
  %v717 = vmul.f32 %v714, %v716
  %v718 = vadd.f32 %v714, %v717
  %vm719 = vweird.f32 %v713
  %vm720 = vweird.f32 %v714
  %vm721 = vmor %vm719, %vm720
  %v722 = vsel %vm721, %v714, %v718
  %v723 = vand.u32 2147483647, %v713
  %vm724 = vcmp.eq.f32.partialorder %v723, 8.507059e+37
  %v725 = vand.u32 %v713, 2147483648
  %v726 = vor.u32 1.1754944e-38, %v725
  %v727 = vsel %vm724, %v726, %v722
  %v728 = vmul.f32 %v703, %v727
  %v729 = vmin.f32 %v728, 1.0
  %v730 = vmax.f32 %v729, -1.0
  %v731 = vmul.f32 %v348, %v348
  %v732 = vmin.f32 16.0, %v731
  %v733 = vmul.f32 %v732, 2.1237322e-06
  %v734 = vadd.f32 %v733, 0.00028619796
  %v735 = vmul.f32 %v732, %v734
  %v736 = vadd.f32 %v735, 0.0036580483
  %v737 = vmul.f32 %v732, %v736
  %v738 = vadd.f32 %v737, 0.05243302
  %v739 = vmul.f32 %v732, %v738
  %v740 = vadd.f32 %v739, 0.18741608
  %v741 = vmul.f32 %v732, %v740
  %v742 = vadd.f32 %v741, 1.1283791
  %v743 = vmul.f32 %v348, %v742
  %v744 = vmul.f32 %v732, 3.8918573e-05
  %v745 = vadd.f32 %v744, 0.001143296
  %v746 = vmul.f32 %v732, %v745
  %v747 = vadd.f32 %v746, 0.014752088
  %v748 = vmul.f32 %v732, %v747
  %v749 = vadd.f32 %v748, 0.112945676
  %v750 = vmul.f32 %v732, %v749
  %v751 = vadd.f32 %v750, 0.4994258
  %v752 = vmul.f32 %v732, %v751
  %v753 = vadd.f32 %v752, 1.0
  %v754 = vrcp.pop %v753
  %v755 = vmul.f32 %v753, %v754
  %v756 = vsub.f32 1.0, %v755
  %v757 = vmul.f32 %v754, %v756
  %v758 = vadd.f32 %v754, %v757
  %vm759 = vweird.f32 %v753
  %vm760 = vweird.f32 %v754
  %vm761 = vmor %vm759, %vm760
  %v762 = vsel %vm761, %v754, %v758
  %v763 = vand.u32 2147483647, %v753
  %vm764 = vcmp.eq.f32.partialorder %v763, 8.507059e+37
  %v765 = vand.u32 %v753, 2147483648
  %v766 = vor.u32 1.1754944e-38, %v765
  %v767 = vsel %vm764, %v766, %v762
  %v768 = vmul.f32 %v743, %v767
  %v769 = vmin.f32 %v768, 1.0
  %v770 = vmax.f32 %v769, -1.0
  %v771 = vmul.f32 %v349, %v349
  %v772 = vmin.f32 16.0, %v771
  %v773 = vmul.f32 %v772, 2.1237322e-06
  %v774 = vadd.f32 %v773, 0.00028619796
  %v775 = vmul.f32 %v772, %v774
  %v776 = vadd.f32 %v775, 0.0036580483
  %v777 = vmul.f32 %v772, %v776
  %v778 = vadd.f32 %v777, 0.05243302
  %v779 = vmul.f32 %v772, %v778
  %v780 = vadd.f32 %v779, 0.18741608
  %v781 = vmul.f32 %v772, %v780
  %v782 = vadd.f32 %v781, 1.1283791
  %v783 = vmul.f32 %v349, %v782
  %v784 = vmul.f32 %v772, 3.8918573e-05
  %v785 = vadd.f32 %v784, 0.001143296
  %v786 = vmul.f32 %v772, %v785
  %v787 = vadd.f32 %v786, 0.014752088
  %v788 = vmul.f32 %v772, %v787
  %v789 = vadd.f32 %v788, 0.112945676
  %v790 = vmul.f32 %v772, %v789
  %v791 = vadd.f32 %v790, 0.4994258
  %v792 = vmul.f32 %v772, %v791
  %v793 = vadd.f32 %v792, 1.0
  %v794 = vrcp.pop %v793
  %v795 = vmul.f32 %v793, %v794
  %v796 = vsub.f32 1.0, %v795
  %v797 = vmul.f32 %v794, %v796
  %v798 = vadd.f32 %v794, %v797
  %vm799 = vweird.f32 %v793
  %vm800 = vweird.f32 %v794
  %vm801 = vmor %vm799, %vm800
  %v802 = vsel %vm801, %v794, %v798
  %v803 = vand.u32 2147483647, %v793
  %vm804 = vcmp.eq.f32.partialorder %v803, 8.507059e+37
  %v805 = vand.u32 %v793, 2147483648
  %v806 = vor.u32 1.1754944e-38, %v805
  %v807 = vsel %vm804, %v806, %v802
  %v808 = vmul.f32 %v783, %v807
  %v809 = vmin.f32 %v808, 1.0
  %v810 = vmax.f32 %v809, -1.0
  %v811 = vmul.f32 %v350, %v350
  %v812 = vmin.f32 16.0, %v811
  %v813 = vmul.f32 %v812, 2.1237322e-06
  %v814 = vadd.f32 %v813, 0.00028619796
  %v815 = vmul.f32 %v812, %v814
  %v816 = vadd.f32 %v815, 0.0036580483
  %v817 = vmul.f32 %v812, %v816
  %v818 = vadd.f32 %v817, 0.05243302
  %v819 = vmul.f32 %v812, %v818
  %v820 = vadd.f32 %v819, 0.18741608
  %v821 = vmul.f32 %v812, %v820
  %v822 = vadd.f32 %v821, 1.1283791
  %v823 = vmul.f32 %v350, %v822
  %v824 = vmul.f32 %v812, 3.8918573e-05
  %v825 = vadd.f32 %v824, 0.001143296
  %v826 = vmul.f32 %v812, %v825
  %v827 = vadd.f32 %v826, 0.014752088
  %v828 = vmul.f32 %v812, %v827
  %v829 = vadd.f32 %v828, 0.112945676
  %v830 = vmul.f32 %v812, %v829
  %v831 = vadd.f32 %v830, 0.4994258
  %v832 = vmul.f32 %v812, %v831
  %v833 = vadd.f32 %v832, 1.0
  %v834 = vrcp.pop %v833
  %v835 = vmul.f32 %v833, %v834
  %v836 = vsub.f32 1.0, %v835
  %v837 = vmul.f32 %v834, %v836
  %v838 = vadd.f32 %v834, %v837
  %vm839 = vweird.f32 %v833
  %vm840 = vweird.f32 %v834
  %vm841 = vmor %vm839, %vm840
  %v842 = vsel %vm841, %v834, %v838
  %v843 = vand.u32 2147483647, %v833
  %vm844 = vcmp.eq.f32.partialorder %v843, 8.507059e+37
  %v845 = vand.u32 %v833, 2147483648
  %v846 = vor.u32 1.1754944e-38, %v845
  %v847 = vsel %vm844, %v846, %v842
  %v848 = vmul.f32 %v823, %v847
  %v849 = vmin.f32 %v848, 1.0
  %v850 = vmax.f32 %v849, -1.0
  %v851 = vmul.f32 %v351, %v351
  %v852 = vmin.f32 16.0, %v851
  %v853 = vmul.f32 %v852, 2.1237322e-06
  %v854 = vadd.f32 %v853, 0.00028619796
  %v855 = vmul.f32 %v852, %v854
  %v856 = vadd.f32 %v855, 0.0036580483
  %v857 = vmul.f32 %v852, %v856
  %v858 = vadd.f32 %v857, 0.05243302
  %v859 = vmul.f32 %v852, %v858
  %v860 = vadd.f32 %v859, 0.18741608
  %v861 = vmul.f32 %v852, %v860
  %v862 = vadd.f32 %v861, 1.1283791
  %v863 = vmul.f32 %v351, %v862
  %v864 = vmul.f32 %v852, 3.8918573e-05
  %v865 = vadd.f32 %v864, 0.001143296
  %v866 = vmul.f32 %v852, %v865
  %v867 = vadd.f32 %v866, 0.014752088
  %v868 = vmul.f32 %v852, %v867
  %v869 = vadd.f32 %v868, 0.112945676
  %v870 = vmul.f32 %v852, %v869
  %v871 = vadd.f32 %v870, 0.4994258
  %v872 = vmul.f32 %v852, %v871
  %v873 = vadd.f32 %v872, 1.0
  %v874 = vrcp.pop %v873
  %v875 = vmul.f32 %v873, %v874
  %v876 = vsub.f32 1.0, %v875
  %v877 = vmul.f32 %v874, %v876
  %v878 = vadd.f32 %v874, %v877
  %vm879 = vweird.f32 %v873
  %vm880 = vweird.f32 %v874
  %vm881 = vmor %vm879, %vm880
  %v882 = vsel %vm881, %v874, %v878
  %v883 = vand.u32 2147483647, %v873
  %vm884 = vcmp.eq.f32.partialorder %v883, 8.507059e+37
  %v885 = vand.u32 %v873, 2147483648
  %v886 = vor.u32 1.1754944e-38, %v885
  %v887 = vsel %vm884, %v886, %v882
  %v888 = vmul.f32 %v863, %v887
  %v889 = vmin.f32 %v888, 1.0
  %v890 = vmax.f32 %v889, -1.0
  %v891 = vmul.f32 %v352, %v352
  %v892 = vmin.f32 16.0, %v891
  %v893 = vmul.f32 %v892, 2.1237322e-06
  %v894 = vadd.f32 %v893, 0.00028619796
  %v895 = vmul.f32 %v892, %v894
  %v896 = vadd.f32 %v895, 0.0036580483
  %v897 = vmul.f32 %v892, %v896
  %v898 = vadd.f32 %v897, 0.05243302
  %v899 = vmul.f32 %v892, %v898
  %v900 = vadd.f32 %v899, 0.18741608
  %v901 = vmul.f32 %v892, %v900
  %v902 = vadd.f32 %v901, 1.1283791
  %v903 = vmul.f32 %v352, %v902
  %v904 = vmul.f32 %v892, 3.8918573e-05
  %v905 = vadd.f32 %v904, 0.001143296
  %v906 = vmul.f32 %v892, %v905
  %v907 = vadd.f32 %v906, 0.014752088
  %v908 = vmul.f32 %v892, %v907
  %v909 = vadd.f32 %v908, 0.112945676
  %v910 = vmul.f32 %v892, %v909
  %v911 = vadd.f32 %v910, 0.4994258
  %v912 = vmul.f32 %v892, %v911
  %v913 = vadd.f32 %v912, 1.0
  %v914 = vrcp.pop %v913
  %v915 = vmul.f32 %v913, %v914
  %v916 = vsub.f32 1.0, %v915
  %v917 = vmul.f32 %v914, %v916
  %v918 = vadd.f32 %v914, %v917
  %vm919 = vweird.f32 %v913
  %vm920 = vweird.f32 %v914
  %vm921 = vmor %vm919, %vm920
  %v922 = vsel %vm921, %v914, %v918
  %v923 = vand.u32 2147483647, %v913
  %vm924 = vcmp.eq.f32.partialorder %v923, 8.507059e+37
  %v925 = vand.u32 %v913, 2147483648
  %v926 = vor.u32 1.1754944e-38, %v925
  %v927 = vsel %vm924, %v926, %v922
  %v928 = vmul.f32 %v903, %v927
  %v929 = vmin.f32 %v928, 1.0
  %v930 = vmax.f32 %v929, -1.0
  %v931 = vmul.f32 %v353, %v353
  %v932 = vmin.f32 16.0, %v931
  %v933 = vmul.f32 %v932, 2.1237322e-06
  %v934 = vadd.f32 %v933, 0.00028619796
  %v935 = vmul.f32 %v932, %v934
  %v936 = vadd.f32 %v935, 0.0036580483
  %v937 = vmul.f32 %v932, %v936
  %v938 = vadd.f32 %v937, 0.05243302
  %v939 = vmul.f32 %v932, %v938
  %v940 = vadd.f32 %v939, 0.18741608
  %v941 = vmul.f32 %v932, %v940
  %v942 = vadd.f32 %v941, 1.1283791
  %v943 = vmul.f32 %v353, %v942
  %v944 = vmul.f32 %v932, 3.8918573e-05
  %v945 = vadd.f32 %v944, 0.001143296
  %v946 = vmul.f32 %v932, %v945
  %v947 = vadd.f32 %v946, 0.014752088
  %v948 = vmul.f32 %v932, %v947
  %v949 = vadd.f32 %v948, 0.112945676
  %v950 = vmul.f32 %v932, %v949
  %v951 = vadd.f32 %v950, 0.4994258
  %v952 = vmul.f32 %v932, %v951
  %v953 = vadd.f32 %v952, 1.0
  %v954 = vrcp.pop %v953
  %v955 = vmul.f32 %v953, %v954
  %v956 = vsub.f32 1.0, %v955
  %v957 = vmul.f32 %v954, %v956
  %v958 = vadd.f32 %v954, %v957
  %vm959 = vweird.f32 %v953
  %vm960 = vweird.f32 %v954
  %vm961 = vmor %vm959, %vm960
  %v962 = vsel %vm961, %v954, %v958
  %v963 = vand.u32 2147483647, %v953
  %vm964 = vcmp.eq.f32.partialorder %v963, 8.507059e+37
  %v965 = vand.u32 %v953, 2147483648
  %v966 = vor.u32 1.1754944e-38, %v965
  %v967 = vsel %vm964, %v966, %v962
  %v968 = vmul.f32 %v943, %v967
  %v969 = vmin.f32 %v968, 1.0
  %v970 = vmax.f32 %v969, -1.0
  %v971 = vmul.f32 %v354, %v354
  %v972 = vmin.f32 16.0, %v971
  %v973 = vmul.f32 %v972, 2.1237322e-06
  %v974 = vadd.f32 %v973, 0.00028619796
  %v975 = vmul.f32 %v972, %v974
  %v976 = vadd.f32 %v975, 0.0036580483
  %v977 = vmul.f32 %v972, %v976
  %v978 = vadd.f32 %v977, 0.05243302
  %v979 = vmul.f32 %v972, %v978
  %v980 = vadd.f32 %v979, 0.18741608
  %v981 = vmul.f32 %v972, %v980
  %v982 = vadd.f32 %v981, 1.1283791
  %v983 = vmul.f32 %v354, %v982
  %v984 = vmul.f32 %v972, 3.8918573e-05
  %v985 = vadd.f32 %v984, 0.001143296
  %v986 = vmul.f32 %v972, %v985
  %v987 = vadd.f32 %v986, 0.014752088
  %v988 = vmul.f32 %v972, %v987
  %v989 = vadd.f32 %v988, 0.112945676
  %v990 = vmul.f32 %v972, %v989
  %v991 = vadd.f32 %v990, 0.4994258
  %v992 = vmul.f32 %v972, %v991
  %v993 = vadd.f32 %v992, 1.0
  %v994 = vrcp.pop %v993
  %v995 = vmul.f32 %v993, %v994
  %v996 = vsub.f32 1.0, %v995
  %v997 = vmul.f32 %v994, %v996
  %v998 = vadd.f32 %v994, %v997
  %vm999 = vweird.f32 %v993
  %vm1000 = vweird.f32 %v994
  %vm1001 = vmor %vm999, %vm1000
  %v1002 = vsel %vm1001, %v994, %v998
  %v1003 = vand.u32 2147483647, %v993
  %vm1004 = vcmp.eq.f32.partialorder %v1003, 8.507059e+37
  %v1005 = vand.u32 %v993, 2147483648
  %v1006 = vor.u32 1.1754944e-38, %v1005
  %v1007 = vsel %vm1004, %v1006, %v1002
  %v1008 = vmul.f32 %v983, %v1007
  %v1009 = vmin.f32 %v1008, 1.0
  %v1010 = vmax.f32 %v1009, -1.0
  %v1011 = vmul.f32 %v355, %v355
  %v1012 = vmin.f32 16.0, %v1011
  %v1013 = vmul.f32 %v1012, 2.1237322e-06
  %v1014 = vadd.f32 %v1013, 0.00028619796
  %v1015 = vmul.f32 %v1012, %v1014
  %v1016 = vadd.f32 %v1015, 0.0036580483
  %v1017 = vmul.f32 %v1012, %v1016
  %v1018 = vadd.f32 %v1017, 0.05243302
  %v1019 = vmul.f32 %v1012, %v1018
  %v1020 = vadd.f32 %v1019, 0.18741608
  %v1021 = vmul.f32 %v1012, %v1020
  %v1022 = vadd.f32 %v1021, 1.1283791
  %v1023 = vmul.f32 %v355, %v1022
  %v1024 = vmul.f32 %v1012, 3.8918573e-05
  %v1025 = vadd.f32 %v1024, 0.001143296
  %v1026 = vmul.f32 %v1012, %v1025
  %v1027 = vadd.f32 %v1026, 0.014752088
  %v1028 = vmul.f32 %v1012, %v1027
  %v1029 = vadd.f32 %v1028, 0.112945676
  %v1030 = vmul.f32 %v1012, %v1029
  %v1031 = vadd.f32 %v1030, 0.4994258
  %v1032 = vmul.f32 %v1012, %v1031
  %v1033 = vadd.f32 %v1032, 1.0
  %v1034 = vrcp.pop %v1033
  %v1035 = vmul.f32 %v1033, %v1034
  %v1036 = vsub.f32 1.0, %v1035
  %v1037 = vmul.f32 %v1034, %v1036
  %v1038 = vadd.f32 %v1034, %v1037
  %vm1039 = vweird.f32 %v1033
  %vm1040 = vweird.f32 %v1034
  %vm1041 = vmor %vm1039, %vm1040
  %v1042 = vsel %vm1041, %v1034, %v1038
  %v1043 = vand.u32 2147483647, %v1033
  %vm1044 = vcmp.eq.f32.partialorder %v1043, 8.507059e+37
  %v1045 = vand.u32 %v1033, 2147483648
  %v1046 = vor.u32 1.1754944e-38, %v1045
  %v1047 = vsel %vm1044, %v1046, %v1042
  %v1048 = vmul.f32 %v1023, %v1047
  %v1049 = vmin.f32 %v1048, 1.0
  %v1050 = vmax.f32 %v1049, -1.0
  %v1051 = vmul.f32 %v356, %v356
  %v1052 = vmin.f32 16.0, %v1051
  %v1053 = vmul.f32 %v1052, 2.1237322e-06
  %v1054 = vadd.f32 %v1053, 0.00028619796
  %v1055 = vmul.f32 %v1052, %v1054
  %v1056 = vadd.f32 %v1055, 0.0036580483
  %v1057 = vmul.f32 %v1052, %v1056
  %v1058 = vadd.f32 %v1057, 0.05243302
  %v1059 = vmul.f32 %v1052, %v1058
  %v1060 = vadd.f32 %v1059, 0.18741608
  %v1061 = vmul.f32 %v1052, %v1060
  %v1062 = vadd.f32 %v1061, 1.1283791
  %v1063 = vmul.f32 %v356, %v1062
  %v1064 = vmul.f32 %v1052, 3.8918573e-05
  %v1065 = vadd.f32 %v1064, 0.001143296
  %v1066 = vmul.f32 %v1052, %v1065
  %v1067 = vadd.f32 %v1066, 0.014752088
  %v1068 = vmul.f32 %v1052, %v1067
  %v1069 = vadd.f32 %v1068, 0.112945676
  %v1070 = vmul.f32 %v1052, %v1069
  %v1071 = vadd.f32 %v1070, 0.4994258
  %v1072 = vmul.f32 %v1052, %v1071
  %v1073 = vadd.f32 %v1072, 1.0
  %v1074 = vrcp.pop %v1073
  %v1075 = vmul.f32 %v1073, %v1074
  %v1076 = vsub.f32 1.0, %v1075
  %v1077 = vmul.f32 %v1074, %v1076
  %v1078 = vadd.f32 %v1074, %v1077
  %vm1079 = vweird.f32 %v1073
  %vm1080 = vweird.f32 %v1074
  %vm1081 = vmor %vm1079, %vm1080
  %v1082 = vsel %vm1081, %v1074, %v1078
  %v1083 = vand.u32 2147483647, %v1073
  %vm1084 = vcmp.eq.f32.partialorder %v1083, 8.507059e+37
  %v1085 = vand.u32 %v1073, 2147483648
  %v1086 = vor.u32 1.1754944e-38, %v1085
  %v1087 = vsel %vm1084, %v1086, %v1082
  %v1088 = vmul.f32 %v1063, %v1087
  %v1089 = vmin.f32 %v1088, 1.0
  %v1090 = vmax.f32 %v1089, -1.0
  %v1091 = vmul.f32 %v357, %v357
  %v1092 = vmin.f32 16.0, %v1091
  %v1093 = vmul.f32 %v1092, 2.1237322e-06
  %v1094 = vadd.f32 %v1093, 0.00028619796
  %v1095 = vmul.f32 %v1092, %v1094
  %v1096 = vadd.f32 %v1095, 0.0036580483
  %v1097 = vmul.f32 %v1092, %v1096
  %v1098 = vadd.f32 %v1097, 0.05243302
  %v1099 = vmul.f32 %v1092, %v1098
  %v1100 = vadd.f32 %v1099, 0.18741608
  %v1101 = vmul.f32 %v1092, %v1100
  %v1102 = vadd.f32 %v1101, 1.1283791
  %v1103 = vmul.f32 %v357, %v1102
  %v1104 = vmul.f32 %v1092, 3.8918573e-05
  %v1105 = vadd.f32 %v1104, 0.001143296
  %v1106 = vmul.f32 %v1092, %v1105
  %v1107 = vadd.f32 %v1106, 0.014752088
  %v1108 = vmul.f32 %v1092, %v1107
  %v1109 = vadd.f32 %v1108, 0.112945676
  %v1110 = vmul.f32 %v1092, %v1109
  %v1111 = vadd.f32 %v1110, 0.4994258
  %v1112 = vmul.f32 %v1092, %v1111
  %v1113 = vadd.f32 %v1112, 1.0
  %v1114 = vrcp.pop %v1113
  %v1115 = vmul.f32 %v1113, %v1114
  %v1116 = vsub.f32 1.0, %v1115
  %v1117 = vmul.f32 %v1114, %v1116
  %v1118 = vadd.f32 %v1114, %v1117
  %vm1119 = vweird.f32 %v1113
  %vm1120 = vweird.f32 %v1114
  %vm1121 = vmor %vm1119, %vm1120
  %v1122 = vsel %vm1121, %v1114, %v1118
  %v1123 = vand.u32 2147483647, %v1113
  %vm1124 = vcmp.eq.f32.partialorder %v1123, 8.507059e+37
  %v1125 = vand.u32 %v1113, 2147483648
  %v1126 = vor.u32 1.1754944e-38, %v1125
  %v1127 = vsel %vm1124, %v1126, %v1122
  %v1128 = vmul.f32 %v1103, %v1127
  %v1129 = vmin.f32 %v1128, 1.0
  %v1130 = vmax.f32 %v1129, -1.0
  %v1131 = vmul.f32 %v358, %v358
  %v1132 = vmin.f32 16.0, %v1131
  %v1133 = vmul.f32 %v1132, 2.1237322e-06
  %v1134 = vadd.f32 %v1133, 0.00028619796
  %v1135 = vmul.f32 %v1132, %v1134
  %v1136 = vadd.f32 %v1135, 0.0036580483
  %v1137 = vmul.f32 %v1132, %v1136
  %v1138 = vadd.f32 %v1137, 0.05243302
  %v1139 = vmul.f32 %v1132, %v1138
  %v1140 = vadd.f32 %v1139, 0.18741608
  %v1141 = vmul.f32 %v1132, %v1140
  %v1142 = vadd.f32 %v1141, 1.1283791
  %v1143 = vmul.f32 %v358, %v1142
  %v1144 = vmul.f32 %v1132, 3.8918573e-05
  %v1145 = vadd.f32 %v1144, 0.001143296
  %v1146 = vmul.f32 %v1132, %v1145
  %v1147 = vadd.f32 %v1146, 0.014752088
  %v1148 = vmul.f32 %v1132, %v1147
  %v1149 = vadd.f32 %v1148, 0.112945676
  %v1150 = vmul.f32 %v1132, %v1149
  %v1151 = vadd.f32 %v1150, 0.4994258
  %v1152 = vmul.f32 %v1132, %v1151
  %v1153 = vadd.f32 %v1152, 1.0
  %v1154 = vrcp.pop %v1153
  %v1155 = vmul.f32 %v1153, %v1154
  %v1156 = vsub.f32 1.0, %v1155
  %v1157 = vmul.f32 %v1154, %v1156
  %v1158 = vadd.f32 %v1154, %v1157
  %vm1159 = vweird.f32 %v1153
  %vm1160 = vweird.f32 %v1154
  %vm1161 = vmor %vm1159, %vm1160
  %v1162 = vsel %vm1161, %v1154, %v1158
  %v1163 = vand.u32 2147483647, %v1153
  %vm1164 = vcmp.eq.f32.partialorder %v1163, 8.507059e+37
  %v1165 = vand.u32 %v1153, 2147483648
  %v1166 = vor.u32 1.1754944e-38, %v1165
  %v1167 = vsel %vm1164, %v1166, %v1162
  %v1168 = vmul.f32 %v1143, %v1167
  %v1169 = vmin.f32 %v1168, 1.0
  %v1170 = vmax.f32 %v1169, -1.0
  %v1171 = vmul.f32 %v359, %v359
  %v1172 = vmin.f32 16.0, %v1171
  %v1173 = vmul.f32 %v1172, 2.1237322e-06
  %v1174 = vadd.f32 %v1173, 0.00028619796
  %v1175 = vmul.f32 %v1172, %v1174
  %v1176 = vadd.f32 %v1175, 0.0036580483
  %v1177 = vmul.f32 %v1172, %v1176
  %v1178 = vadd.f32 %v1177, 0.05243302
  %v1179 = vmul.f32 %v1172, %v1178
  %v1180 = vadd.f32 %v1179, 0.18741608
  %v1181 = vmul.f32 %v1172, %v1180
  %v1182 = vadd.f32 %v1181, 1.1283791
  %v1183 = vmul.f32 %v359, %v1182
  %v1184 = vmul.f32 %v1172, 3.8918573e-05
  %v1185 = vadd.f32 %v1184, 0.001143296
  %v1186 = vmul.f32 %v1172, %v1185
  %v1187 = vadd.f32 %v1186, 0.014752088
  %v1188 = vmul.f32 %v1172, %v1187
  %v1189 = vadd.f32 %v1188, 0.112945676
  %v1190 = vmul.f32 %v1172, %v1189
  %v1191 = vadd.f32 %v1190, 0.4994258
  %v1192 = vmul.f32 %v1172, %v1191
  %v1193 = vadd.f32 %v1192, 1.0
  %v1194 = vrcp.pop %v1193
  %v1195 = vmul.f32 %v1193, %v1194
  %v1196 = vsub.f32 1.0, %v1195
  %v1197 = vmul.f32 %v1194, %v1196
  %v1198 = vadd.f32 %v1194, %v1197
  %vm1199 = vweird.f32 %v1193
  %vm1200 = vweird.f32 %v1194
  %vm1201 = vmor %vm1199, %vm1200
  %v1202 = vsel %vm1201, %v1194, %v1198
  %v1203 = vand.u32 2147483647, %v1193
  %vm1204 = vcmp.eq.f32.partialorder %v1203, 8.507059e+37
  %v1205 = vand.u32 %v1193, 2147483648
  %v1206 = vor.u32 1.1754944e-38, %v1205
  %v1207 = vsel %vm1204, %v1206, %v1202
  %v1208 = vmul.f32 %v1183, %v1207
  %v1209 = vmin.f32 %v1208, 1.0
  %v1210 = vmax.f32 %v1209, -1.0
  %v1211 = vmul.f32 %v360, %v360
  %v1212 = vmin.f32 16.0, %v1211
  %v1213 = vmul.f32 %v1212, 2.1237322e-06
  %v1214 = vadd.f32 %v1213, 0.00028619796
  %v1215 = vmul.f32 %v1212, %v1214
  %v1216 = vadd.f32 %v1215, 0.0036580483
  %v1217 = vmul.f32 %v1212, %v1216
  %v1218 = vadd.f32 %v1217, 0.05243302
  %v1219 = vmul.f32 %v1212, %v1218
  %v1220 = vadd.f32 %v1219, 0.18741608
  %v1221 = vmul.f32 %v1212, %v1220
  %v1222 = vadd.f32 %v1221, 1.1283791
  %v1223 = vmul.f32 %v360, %v1222
  %v1224 = vmul.f32 %v1212, 3.8918573e-05
  %v1225 = vadd.f32 %v1224, 0.001143296
  %v1226 = vmul.f32 %v1212, %v1225
  %v1227 = vadd.f32 %v1226, 0.014752088
  %v1228 = vmul.f32 %v1212, %v1227
  %v1229 = vadd.f32 %v1228, 0.112945676
  %v1230 = vmul.f32 %v1212, %v1229
  %v1231 = vadd.f32 %v1230, 0.4994258
  %v1232 = vmul.f32 %v1212, %v1231
  %v1233 = vadd.f32 %v1232, 1.0
  %v1234 = vrcp.pop %v1233
  %v1235 = vmul.f32 %v1233, %v1234
  %v1236 = vsub.f32 1.0, %v1235
  %v1237 = vmul.f32 %v1234, %v1236
  %v1238 = vadd.f32 %v1234, %v1237
  %vm1239 = vweird.f32 %v1233
  %vm1240 = vweird.f32 %v1234
  %vm1241 = vmor %vm1239, %vm1240
  %v1242 = vsel %vm1241, %v1234, %v1238
  %v1243 = vand.u32 2147483647, %v1233
  %vm1244 = vcmp.eq.f32.partialorder %v1243, 8.507059e+37
  %v1245 = vand.u32 %v1233, 2147483648
  %v1246 = vor.u32 1.1754944e-38, %v1245
  %v1247 = vsel %vm1244, %v1246, %v1242
  %v1248 = vmul.f32 %v1223, %v1247
  %v1249 = vmin.f32 %v1248, 1.0
  %v1250 = vmax.f32 %v1249, -1.0
  %v1251 = vmul.f32 %v361, %v361
  %v1252 = vmin.f32 16.0, %v1251
  %v1253 = vmul.f32 %v1252, 2.1237322e-06
  %v1254 = vadd.f32 %v1253, 0.00028619796
  %v1255 = vmul.f32 %v1252, %v1254
  %v1256 = vadd.f32 %v1255, 0.0036580483
  %v1257 = vmul.f32 %v1252, %v1256
  %v1258 = vadd.f32 %v1257, 0.05243302
  %v1259 = vmul.f32 %v1252, %v1258
  %v1260 = vadd.f32 %v1259, 0.18741608
  %v1261 = vmul.f32 %v1252, %v1260
  %v1262 = vadd.f32 %v1261, 1.1283791
  %v1263 = vmul.f32 %v361, %v1262
  %v1264 = vmul.f32 %v1252, 3.8918573e-05
  %v1265 = vadd.f32 %v1264, 0.001143296
  %v1266 = vmul.f32 %v1252, %v1265
  %v1267 = vadd.f32 %v1266, 0.014752088
  %v1268 = vmul.f32 %v1252, %v1267
  %v1269 = vadd.f32 %v1268, 0.112945676
  %v1270 = vmul.f32 %v1252, %v1269
  %v1271 = vadd.f32 %v1270, 0.4994258
  %v1272 = vmul.f32 %v1252, %v1271
  %v1273 = vadd.f32 %v1272, 1.0
  %v1274 = vrcp.pop %v1273
  %v1275 = vmul.f32 %v1273, %v1274
  %v1276 = vsub.f32 1.0, %v1275
  %v1277 = vmul.f32 %v1274, %v1276
  %v1278 = vadd.f32 %v1274, %v1277
  %vm1279 = vweird.f32 %v1273
  %vm1280 = vweird.f32 %v1274
  %vm1281 = vmor %vm1279, %vm1280
  %v1282 = vsel %vm1281, %v1274, %v1278
  %v1283 = vand.u32 2147483647, %v1273
  %vm1284 = vcmp.eq.f32.partialorder %v1283, 8.507059e+37
  %v1285 = vand.u32 %v1273, 2147483648
  %v1286 = vor.u32 1.1754944e-38, %v1285
  %v1287 = vsel %vm1284, %v1286, %v1282
  %v1288 = vmul.f32 %v1263, %v1287
  %v1289 = vmin.f32 %v1288, 1.0
  %v1290 = vmax.f32 %v1289, -1.0
  %v1291 = vmul.f32 %v362, %v362
  %v1292 = vmin.f32 16.0, %v1291
  %v1293 = vmul.f32 %v1292, 2.1237322e-06
  %v1294 = vadd.f32 %v1293, 0.00028619796
  %v1295 = vmul.f32 %v1292, %v1294
  %v1296 = vadd.f32 %v1295, 0.0036580483
  %v1297 = vmul.f32 %v1292, %v1296
  %v1298 = vadd.f32 %v1297, 0.05243302
  %v1299 = vmul.f32 %v1292, %v1298
  %v1300 = vadd.f32 %v1299, 0.18741608
  %v1301 = vmul.f32 %v1292, %v1300
  %v1302 = vadd.f32 %v1301, 1.1283791
  %v1303 = vmul.f32 %v362, %v1302
  %v1304 = vmul.f32 %v1292, 3.8918573e-05
  %v1305 = vadd.f32 %v1304, 0.001143296
  %v1306 = vmul.f32 %v1292, %v1305
  %v1307 = vadd.f32 %v1306, 0.014752088
  %v1308 = vmul.f32 %v1292, %v1307
  %v1309 = vadd.f32 %v1308, 0.112945676
  %v1310 = vmul.f32 %v1292, %v1309
  %v1311 = vadd.f32 %v1310, 0.4994258
  %v1312 = vmul.f32 %v1292, %v1311
  %v1313 = vadd.f32 %v1312, 1.0
  %v1314 = vrcp.pop %v1313
  %v1315 = vmul.f32 %v1313, %v1314
  %v1316 = vsub.f32 1.0, %v1315
  %v1317 = vmul.f32 %v1314, %v1316
  %v1318 = vadd.f32 %v1314, %v1317
  %vm1319 = vweird.f32 %v1313
  %vm1320 = vweird.f32 %v1314
  %vm1321 = vmor %vm1319, %vm1320
  %v1322 = vsel %vm1321, %v1314, %v1318
  %v1323 = vand.u32 2147483647, %v1313
  %vm1324 = vcmp.eq.f32.partialorder %v1323, 8.507059e+37
  %v1325 = vand.u32 %v1313, 2147483648
  %v1326 = vor.u32 1.1754944e-38, %v1325
  %v1327 = vsel %vm1324, %v1326, %v1322
  %v1328 = vmul.f32 %v1303, %v1327
  %v1329 = vmin.f32 %v1328, 1.0
  %v1330 = vmax.f32 %v1329, -1.0
  %v1331 = vmul.f32 %v363, %v363
  %v1332 = vmin.f32 16.0, %v1331
  %v1333 = vmul.f32 %v1332, 2.1237322e-06
  %v1334 = vadd.f32 %v1333, 0.00028619796
  %v1335 = vmul.f32 %v1332, %v1334
  %v1336 = vadd.f32 %v1335, 0.0036580483
  %v1337 = vmul.f32 %v1332, %v1336
  %v1338 = vadd.f32 %v1337, 0.05243302
  %v1339 = vmul.f32 %v1332, %v1338
  %v1340 = vadd.f32 %v1339, 0.18741608
  %v1341 = vmul.f32 %v1332, %v1340
  %v1342 = vadd.f32 %v1341, 1.1283791
  %v1343 = vmul.f32 %v363, %v1342
  %v1344 = vmul.f32 %v1332, 3.8918573e-05
  %v1345 = vadd.f32 %v1344, 0.001143296
  %v1346 = vmul.f32 %v1332, %v1345
  %v1347 = vadd.f32 %v1346, 0.014752088
  %v1348 = vmul.f32 %v1332, %v1347
  %v1349 = vadd.f32 %v1348, 0.112945676
  %v1350 = vmul.f32 %v1332, %v1349
  %v1351 = vadd.f32 %v1350, 0.4994258
  %v1352 = vmul.f32 %v1332, %v1351
  %v1353 = vadd.f32 %v1352, 1.0
  %v1354 = vrcp.pop %v1353
  %v1355 = vmul.f32 %v1353, %v1354
  %v1356 = vsub.f32 1.0, %v1355
  %v1357 = vmul.f32 %v1354, %v1356
  %v1358 = vadd.f32 %v1354, %v1357
  %vm1359 = vweird.f32 %v1353
  %vm1360 = vweird.f32 %v1354
  %vm1361 = vmor %vm1359, %vm1360
  %v1362 = vsel %vm1361, %v1354, %v1358
  %v1363 = vand.u32 2147483647, %v1353
  %vm1364 = vcmp.eq.f32.partialorder %v1363, 8.507059e+37
  %v1365 = vand.u32 %v1353, 2147483648
  %v1366 = vor.u32 1.1754944e-38, %v1365
  %v1367 = vsel %vm1364, %v1366, %v1362
  %v1368 = vmul.f32 %v1343, %v1367
  %v1369 = vmin.f32 %v1368, 1.0
  %v1370 = vmax.f32 %v1369, -1.0
  %v1371 = vmul.f32 %v364, %v364
  %v1372 = vmin.f32 16.0, %v1371
  %v1373 = vmul.f32 %v1372, 2.1237322e-06
  %v1374 = vadd.f32 %v1373, 0.00028619796
  %v1375 = vmul.f32 %v1372, %v1374
  %v1376 = vadd.f32 %v1375, 0.0036580483
  %v1377 = vmul.f32 %v1372, %v1376
  %v1378 = vadd.f32 %v1377, 0.05243302
  %v1379 = vmul.f32 %v1372, %v1378
  %v1380 = vadd.f32 %v1379, 0.18741608
  %v1381 = vmul.f32 %v1372, %v1380
  %v1382 = vadd.f32 %v1381, 1.1283791
  %v1383 = vmul.f32 %v364, %v1382
  %v1384 = vmul.f32 %v1372, 3.8918573e-05
  %v1385 = vadd.f32 %v1384, 0.001143296
  %v1386 = vmul.f32 %v1372, %v1385
  %v1387 = vadd.f32 %v1386, 0.014752088
  %v1388 = vmul.f32 %v1372, %v1387
  %v1389 = vadd.f32 %v1388, 0.112945676
  %v1390 = vmul.f32 %v1372, %v1389
  %v1391 = vadd.f32 %v1390, 0.4994258
  %v1392 = vmul.f32 %v1372, %v1391
  %v1393 = vadd.f32 %v1392, 1.0
  %v1394 = vrcp.pop %v1393
  %v1395 = vmul.f32 %v1393, %v1394
  %v1396 = vsub.f32 1.0, %v1395
  %v1397 = vmul.f32 %v1394, %v1396
  %v1398 = vadd.f32 %v1394, %v1397
  %vm1399 = vweird.f32 %v1393
  %vm1400 = vweird.f32 %v1394
  %vm1401 = vmor %vm1399, %vm1400
  %v1402 = vsel %vm1401, %v1394, %v1398
  %v1403 = vand.u32 2147483647, %v1393
  %vm1404 = vcmp.eq.f32.partialorder %v1403, 8.507059e+37
  %v1405 = vand.u32 %v1393, 2147483648
  %v1406 = vor.u32 1.1754944e-38, %v1405
  %v1407 = vsel %vm1404, %v1406, %v1402
  %v1408 = vmul.f32 %v1383, %v1407
  %v1409 = vmin.f32 %v1408, 1.0
  %v1410 = vmax.f32 %v1409, -1.0
  %v1411 = vmul.f32 %v365, %v365
  %v1412 = vmin.f32 16.0, %v1411
  %v1413 = vmul.f32 %v1412, 2.1237322e-06
  %v1414 = vadd.f32 %v1413, 0.00028619796
  %v1415 = vmul.f32 %v1412, %v1414
  %v1416 = vadd.f32 %v1415, 0.0036580483
  %v1417 = vmul.f32 %v1412, %v1416
  %v1418 = vadd.f32 %v1417, 0.05243302
  %v1419 = vmul.f32 %v1412, %v1418
  %v1420 = vadd.f32 %v1419, 0.18741608
  %v1421 = vmul.f32 %v1412, %v1420
  %v1422 = vadd.f32 %v1421, 1.1283791
  %v1423 = vmul.f32 %v365, %v1422
  %v1424 = vmul.f32 %v1412, 3.8918573e-05
  %v1425 = vadd.f32 %v1424, 0.001143296
  %v1426 = vmul.f32 %v1412, %v1425
  %v1427 = vadd.f32 %v1426, 0.014752088
  %v1428 = vmul.f32 %v1412, %v1427
  %v1429 = vadd.f32 %v1428, 0.112945676
  %v1430 = vmul.f32 %v1412, %v1429
  %v1431 = vadd.f32 %v1430, 0.4994258
  %v1432 = vmul.f32 %v1412, %v1431
  %v1433 = vadd.f32 %v1432, 1.0
  %v1434 = vrcp.pop %v1433
  %v1435 = vmul.f32 %v1433, %v1434
  %v1436 = vsub.f32 1.0, %v1435
  %v1437 = vmul.f32 %v1434, %v1436
  %v1438 = vadd.f32 %v1434, %v1437
  %vm1439 = vweird.f32 %v1433
  %vm1440 = vweird.f32 %v1434
  %vm1441 = vmor %vm1439, %vm1440
  %v1442 = vsel %vm1441, %v1434, %v1438
  %v1443 = vand.u32 2147483647, %v1433
  %vm1444 = vcmp.eq.f32.partialorder %v1443, 8.507059e+37
  %v1445 = vand.u32 %v1433, 2147483648
  %v1446 = vor.u32 1.1754944e-38, %v1445
  %v1447 = vsel %vm1444, %v1446, %v1442
  %v1448 = vmul.f32 %v1423, %v1447
  %v1449 = vmin.f32 %v1448, 1.0
  %v1450 = vmax.f32 %v1449, -1.0
  %v1451 = vmul.f32 %v366, %v366
  %v1452 = vmin.f32 16.0, %v1451
  %v1453 = vmul.f32 %v1452, 2.1237322e-06
  %v1454 = vadd.f32 %v1453, 0.00028619796
  %v1455 = vmul.f32 %v1452, %v1454
  %v1456 = vadd.f32 %v1455, 0.0036580483
  %v1457 = vmul.f32 %v1452, %v1456
  %v1458 = vadd.f32 %v1457, 0.05243302
  %v1459 = vmul.f32 %v1452, %v1458
  %v1460 = vadd.f32 %v1459, 0.18741608
  %v1461 = vmul.f32 %v1452, %v1460
  %v1462 = vadd.f32 %v1461, 1.1283791
  %v1463 = vmul.f32 %v366, %v1462
  %v1464 = vmul.f32 %v1452, 3.8918573e-05
  %v1465 = vadd.f32 %v1464, 0.001143296
  %v1466 = vmul.f32 %v1452, %v1465
  %v1467 = vadd.f32 %v1466, 0.014752088
  %v1468 = vmul.f32 %v1452, %v1467
  %v1469 = vadd.f32 %v1468, 0.112945676
  %v1470 = vmul.f32 %v1452, %v1469
  %v1471 = vadd.f32 %v1470, 0.4994258
  %v1472 = vmul.f32 %v1452, %v1471
  %v1473 = vadd.f32 %v1472, 1.0
  %v1474 = vrcp.pop %v1473
  %v1475 = vmul.f32 %v1473, %v1474
  %v1476 = vsub.f32 1.0, %v1475
  %v1477 = vmul.f32 %v1474, %v1476
  %v1478 = vadd.f32 %v1474, %v1477
  %vm1479 = vweird.f32 %v1473
  %vm1480 = vweird.f32 %v1474
  %vm1481 = vmor %vm1479, %vm1480
  %v1482 = vsel %vm1481, %v1474, %v1478
  %v1483 = vand.u32 2147483647, %v1473
  %vm1484 = vcmp.eq.f32.partialorder %v1483, 8.507059e+37
  %v1485 = vand.u32 %v1473, 2147483648
  %v1486 = vor.u32 1.1754944e-38, %v1485
  %v1487 = vsel %vm1484, %v1486, %v1482
  %v1488 = vmul.f32 %v1463, %v1487
  %v1489 = vmin.f32 %v1488, 1.0
  %v1490 = vmax.f32 %v1489, -1.0
  %v1491 = vmul.f32 %v367, %v367
  %v1492 = vmin.f32 16.0, %v1491
  %v1493 = vmul.f32 %v1492, 2.1237322e-06
  %v1494 = vadd.f32 %v1493, 0.00028619796
  %v1495 = vmul.f32 %v1492, %v1494
  %v1496 = vadd.f32 %v1495, 0.0036580483
  %v1497 = vmul.f32 %v1492, %v1496
  %v1498 = vadd.f32 %v1497, 0.05243302
  %v1499 = vmul.f32 %v1492, %v1498
  %v1500 = vadd.f32 %v1499, 0.18741608
  %v1501 = vmul.f32 %v1492, %v1500
  %v1502 = vadd.f32 %v1501, 1.1283791
  %v1503 = vmul.f32 %v367, %v1502
  %v1504 = vmul.f32 %v1492, 3.8918573e-05
  %v1505 = vadd.f32 %v1504, 0.001143296
  %v1506 = vmul.f32 %v1492, %v1505
  %v1507 = vadd.f32 %v1506, 0.014752088
  %v1508 = vmul.f32 %v1492, %v1507
  %v1509 = vadd.f32 %v1508, 0.112945676
  %v1510 = vmul.f32 %v1492, %v1509
  %v1511 = vadd.f32 %v1510, 0.4994258
  %v1512 = vmul.f32 %v1492, %v1511
  %v1513 = vadd.f32 %v1512, 1.0
  %v1514 = vrcp.pop %v1513
  %v1515 = vmul.f32 %v1513, %v1514
  %v1516 = vsub.f32 1.0, %v1515
  %v1517 = vmul.f32 %v1514, %v1516
  %v1518 = vadd.f32 %v1514, %v1517
  %vm1519 = vweird.f32 %v1513
  %vm1520 = vweird.f32 %v1514
  %vm1521 = vmor %vm1519, %vm1520
  %v1522 = vsel %vm1521, %v1514, %v1518
  %v1523 = vand.u32 2147483647, %v1513
  %vm1524 = vcmp.eq.f32.partialorder %v1523, 8.507059e+37
  %v1525 = vand.u32 %v1513, 2147483648
  %v1526 = vor.u32 1.1754944e-38, %v1525
  %v1527 = vsel %vm1524, %v1526, %v1522
  %v1528 = vmul.f32 %v1503, %v1527
  %v1529 = vmin.f32 %v1528, 1.0
  %v1530 = vmax.f32 %v1529, -1.0
  %v1531 = vmul.f32 %v368, %v368
  %v1532 = vmin.f32 16.0, %v1531
  %v1533 = vmul.f32 %v1532, 2.1237322e-06
  %v1534 = vadd.f32 %v1533, 0.00028619796
  %v1535 = vmul.f32 %v1532, %v1534
  %v1536 = vadd.f32 %v1535, 0.0036580483
  %v1537 = vmul.f32 %v1532, %v1536
  %v1538 = vadd.f32 %v1537, 0.05243302
  %v1539 = vmul.f32 %v1532, %v1538
  %v1540 = vadd.f32 %v1539, 0.18741608
  %v1541 = vmul.f32 %v1532, %v1540
  %v1542 = vadd.f32 %v1541, 1.1283791
  %v1543 = vmul.f32 %v368, %v1542
  %v1544 = vmul.f32 %v1532, 3.8918573e-05
  %v1545 = vadd.f32 %v1544, 0.001143296
  %v1546 = vmul.f32 %v1532, %v1545
  %v1547 = vadd.f32 %v1546, 0.014752088
  %v1548 = vmul.f32 %v1532, %v1547
  %v1549 = vadd.f32 %v1548, 0.112945676
  %v1550 = vmul.f32 %v1532, %v1549
  %v1551 = vadd.f32 %v1550, 0.4994258
  %v1552 = vmul.f32 %v1532, %v1551
  %v1553 = vadd.f32 %v1552, 1.0
  %v1554 = vrcp.pop %v1553
  %v1555 = vmul.f32 %v1553, %v1554
  %v1556 = vsub.f32 1.0, %v1555
  %v1557 = vmul.f32 %v1554, %v1556
  %v1558 = vadd.f32 %v1554, %v1557
  %vm1559 = vweird.f32 %v1553
  %vm1560 = vweird.f32 %v1554
  %vm1561 = vmor %vm1559, %vm1560
  %v1562 = vsel %vm1561, %v1554, %v1558
  %v1563 = vand.u32 2147483647, %v1553
  %vm1564 = vcmp.eq.f32.partialorder %v1563, 8.507059e+37
  %v1565 = vand.u32 %v1553, 2147483648
  %v1566 = vor.u32 1.1754944e-38, %v1565
  %v1567 = vsel %vm1564, %v1566, %v1562
  %v1568 = vmul.f32 %v1543, %v1567
  %v1569 = vmin.f32 %v1568, 1.0
  %v1570 = vmax.f32 %v1569, -1.0
  %v1571 = vmul.f32 %v369, %v369
  %v1572 = vmin.f32 16.0, %v1571
  %v1573 = vmul.f32 %v1572, 2.1237322e-06
  %v1574 = vadd.f32 %v1573, 0.00028619796
  %v1575 = vmul.f32 %v1572, %v1574
  %v1576 = vadd.f32 %v1575, 0.0036580483
  %v1577 = vmul.f32 %v1572, %v1576
  %v1578 = vadd.f32 %v1577, 0.05243302
  %v1579 = vmul.f32 %v1572, %v1578
  %v1580 = vadd.f32 %v1579, 0.18741608
  %v1581 = vmul.f32 %v1572, %v1580
  %v1582 = vadd.f32 %v1581, 1.1283791
  %v1583 = vmul.f32 %v369, %v1582
  %v1584 = vmul.f32 %v1572, 3.8918573e-05
  %v1585 = vadd.f32 %v1584, 0.001143296
  %v1586 = vmul.f32 %v1572, %v1585
  %v1587 = vadd.f32 %v1586, 0.014752088
  %v1588 = vmul.f32 %v1572, %v1587
  %v1589 = vadd.f32 %v1588, 0.112945676
  %v1590 = vmul.f32 %v1572, %v1589
  %v1591 = vadd.f32 %v1590, 0.4994258
  %v1592 = vmul.f32 %v1572, %v1591
  %v1593 = vadd.f32 %v1592, 1.0
  %v1594 = vrcp.pop %v1593
  %v1595 = vmul.f32 %v1593, %v1594
  %v1596 = vsub.f32 1.0, %v1595
  %v1597 = vmul.f32 %v1594, %v1596
  %v1598 = vadd.f32 %v1594, %v1597
  %vm1599 = vweird.f32 %v1593
  %vm1600 = vweird.f32 %v1594
  %vm1601 = vmor %vm1599, %vm1600
  %v1602 = vsel %vm1601, %v1594, %v1598
  %v1603 = vand.u32 2147483647, %v1593
  %vm1604 = vcmp.eq.f32.partialorder %v1603, 8.507059e+37
  %v1605 = vand.u32 %v1593, 2147483648
  %v1606 = vor.u32 1.1754944e-38, %v1605
  %v1607 = vsel %vm1604, %v1606, %v1602
  %v1608 = vmul.f32 %v1583, %v1607
  %v1609 = vmin.f32 %v1608, 1.0
  %v1610 = vmax.f32 %v1609, -1.0
  %v1611 = vmul.f32 %v370, %v370
  %v1612 = vmin.f32 16.0, %v1611
  %v1613 = vmul.f32 %v1612, 2.1237322e-06
  %v1614 = vadd.f32 %v1613, 0.00028619796
  %v1615 = vmul.f32 %v1612, %v1614
  %v1616 = vadd.f32 %v1615, 0.0036580483
  %v1617 = vmul.f32 %v1612, %v1616
  %v1618 = vadd.f32 %v1617, 0.05243302
  %v1619 = vmul.f32 %v1612, %v1618
  %v1620 = vadd.f32 %v1619, 0.18741608
  %v1621 = vmul.f32 %v1612, %v1620
  %v1622 = vadd.f32 %v1621, 1.1283791
  %v1623 = vmul.f32 %v370, %v1622
  %v1624 = vmul.f32 %v1612, 3.8918573e-05
  %v1625 = vadd.f32 %v1624, 0.001143296
  %v1626 = vmul.f32 %v1612, %v1625
  %v1627 = vadd.f32 %v1626, 0.014752088
  %v1628 = vmul.f32 %v1612, %v1627
  %v1629 = vadd.f32 %v1628, 0.112945676
  %v1630 = vmul.f32 %v1612, %v1629
  %v1631 = vadd.f32 %v1630, 0.4994258
  %v1632 = vmul.f32 %v1612, %v1631
  %v1633 = vadd.f32 %v1632, 1.0
  %v1634 = vrcp.pop %v1633
  %v1635 = vmul.f32 %v1633, %v1634
  %v1636 = vsub.f32 1.0, %v1635
  %v1637 = vmul.f32 %v1634, %v1636
  %v1638 = vadd.f32 %v1634, %v1637
  %vm1639 = vweird.f32 %v1633
  %vm1640 = vweird.f32 %v1634
  %vm1641 = vmor %vm1639, %vm1640
  %v1642 = vsel %vm1641, %v1634, %v1638
  %v1643 = vand.u32 2147483647, %v1633
  %vm1644 = vcmp.eq.f32.partialorder %v1643, 8.507059e+37
  %v1645 = vand.u32 %v1633, 2147483648
  %v1646 = vor.u32 1.1754944e-38, %v1645
  %v1647 = vsel %vm1644, %v1646, %v1642
  %v1648 = vmul.f32 %v1623, %v1647
  %v1649 = vmin.f32 %v1648, 1.0
  %v1650 = vmax.f32 %v1649, -1.0
  %v1651 = vadd.f32 %v410, 1.0
  %v1652 = vadd.f32 %v450, 1.0
  %v1653 = vadd.f32 %v490, 1.0
  %v1654 = vadd.f32 %v530, 1.0
  %v1655 = vadd.f32 %v570, 1.0
  %v1656 = vadd.f32 %v610, 1.0
  %v1657 = vadd.f32 %v650, 1.0
  %v1658 = vadd.f32 %v690, 1.0
  %v1659 = vadd.f32 %v730, 1.0
  %v1660 = vadd.f32 %v770, 1.0
  %v1661 = vadd.f32 %v810, 1.0
  %v1662 = vadd.f32 %v850, 1.0
  %v1663 = vadd.f32 %v890, 1.0
  %v1664 = vadd.f32 %v930, 1.0
  %v1665 = vadd.f32 %v970, 1.0
  %v1666 = vadd.f32 %v1010, 1.0
  %v1667 = vadd.f32 %v1050, 1.0
  %v1668 = vadd.f32 %v1090, 1.0
  %v1669 = vadd.f32 %v1130, 1.0
  %v1670 = vadd.f32 %v1170, 1.0
  %v1671 = vadd.f32 %v1210, 1.0
  %v1672 = vadd.f32 %v1250, 1.0
  %v1673 = vadd.f32 %v1290, 1.0
  %v1674 = vadd.f32 %v1330, 1.0
  %v1675 = vadd.f32 %v1370, 1.0
  %v1676 = vadd.f32 %v1410, 1.0
  %v1677 = vadd.f32 %v1450, 1.0
  %v1678 = vadd.f32 %v1490, 1.0
  %v1679 = vadd.f32 %v1530, 1.0
  %v1680 = vadd.f32 %v1570, 1.0
  %v1681 = vadd.f32 %v1610, 1.0
  %v1682 = vadd.f32 %v1650, 1.0
  %v1683 = vmul.f32 %v307, %v1651
  %v1684 = vmul.f32 %v308, %v1652
  %v1685 = vmul.f32 %v309, %v1653
  %v1686 = vmul.f32 %v310, %v1654
  %v1687 = vmul.f32 %v311, %v1655
  %v1688 = vmul.f32 %v312, %v1656
  %v1689 = vmul.f32 %v313, %v1657
  %v1690 = vmul.f32 %v314, %v1658
  %v1691 = vmul.f32 %v315, %v1659
  %v1692 = vmul.f32 %v316, %v1660
  %v1693 = vmul.f32 %v317, %v1661
  %v1694 = vmul.f32 %v318, %v1662
  %v1695 = vmul.f32 %v319, %v1663
  %v1696 = vmul.f32 %v320, %v1664
  %v1697 = vmul.f32 %v321, %v1665
  %v1698 = vmul.f32 %v322, %v1666
  %v1699 = vmul.f32 %v323, %v1667
  %v1700 = vmul.f32 %v324, %v1668
  %v1701 = vmul.f32 %v325, %v1669
  %v1702 = vmul.f32 %v326, %v1670
  %v1703 = vmul.f32 %v327, %v1671
  %v1704 = vmul.f32 %v328, %v1672
  %v1705 = vmul.f32 %v329, %v1673
  %v1706 = vmul.f32 %v330, %v1674
  %v1707 = vmul.f32 %v331, %v1675
  %v1708 = vmul.f32 %v332, %v1676
  %v1709 = vmul.f32 %v333, %v1677
  %v1710 = vmul.f32 %v334, %v1678
  %v1711 = vmul.f32 %v335, %v1679
  %v1712 = vmul.f32 %v336, %v1680
  %v1713 = vmul.f32 %v337, %v1681
  %v1714 = vmul.f32 %v338, %v1682
  %v1715 = vld [vmem:[#allocation2] sm:$0xff]
  %v1716 = vld [vmem:[#allocation2 + $0x8] sm:$0xff]
  %v1717 = vld [vmem:[#allocation2 + $0x10] sm:$0xff]
  %v1718 = vld [vmem:[#allocation2 + $0x18] sm:$0xff]
  %v1719 = vld [vmem:[#allocation2 + $0x20] sm:$0xff]
  %v1720 = vld [vmem:[#allocation2 + $0x28] sm:$0xff]
  %v1721 = vld [vmem:[#allocation2 + $0x30] sm:$0xff]
  %v1722 = vld [vmem:[#allocation2 + $0x38] sm:$0xff]
  %v1723 = vld [vmem:[#allocation2 + $0x40] sm:$0xff]
  %v1724 = vld [vmem:[#allocation2 + $0x48] sm:$0xff]
  %v1725 = vld [vmem:[#allocation2 + $0x50] sm:$0xff]
  %v1726 = vld [vmem:[#allocation2 + $0x58] sm:$0xff]
  %v1727 = vld [vmem:[#allocation2 + $0x60] sm:$0xff]
  %v1728 = vld [vmem:[#allocation2 + $0x68] sm:$0xff]
  %v1729 = vld [vmem:[#allocation2 + $0x70] sm:$0xff]
  %v1730 = vld [vmem:[#allocation2 + $0x78] sm:$0xff]
  %v1731 = vld [vmem:[#allocation2 + $0x80] sm:$0xff]
  %v1732 = vld [vmem:[#allocation2 + $0x88] sm:$0xff]
  %v1733 = vld [vmem:[#allocation2 + $0x90] sm:$0xff]
  %v1734 = vld [vmem:[#allocation2 + $0x98] sm:$0xff]
  %v1735 = vld [vmem:[#allocation2 + $0xa0] sm:$0xff]
  %v1736 = vld [vmem:[#allocation2 + $0xa8] sm:$0xff]
  %v1737 = vld [vmem:[#allocation2 + $0xb0] sm:$0xff]
  %v1738 = vld [vmem:[#allocation2 + $0xb8] sm:$0xff]
  %v1739 = vld [vmem:[#allocation2 + $0xc0] sm:$0xff]
  %v1740 = vld [vmem:[#allocation2 + $0xc8] sm:$0xff]
  %v1741 = vld [vmem:[#allocation2 + $0xd0] sm:$0xff]
  %v1742 = vld [vmem:[#allocation2 + $0xd8] sm:$0xff]
  %v1743 = vld [vmem:[#allocation2 + $0xe0] sm:$0xff]
  %v1744 = vld [vmem:[#allocation2 + $0xe8] sm:$0xff]
  %v1745 = vld [vmem:[#allocation2 + $0xf0] sm:$0xff]
  %v1746 = vld [vmem:[#allocation2 + $0xf8] sm:$0xff]
  %v1747 = vld [vmem:[%s3] sm:$0xff]
  %v1748 = vld [vmem:[%s3 + $0x8] sm:$0xff]
  %v1749 = vld [vmem:[%s3 + $0x10] sm:$0xff]
  %v1750 = vld [vmem:[%s3 + $0x18] sm:$0xff]
  %v1751 = vld [vmem:[%s3 + $0x20] sm:$0xff]
  %v1752 = vld [vmem:[%s3 + $0x28] sm:$0xff]
  %v1753 = vld [vmem:[%s3 + $0x30] sm:$0xff]
  %v1754 = vld [vmem:[%s3 + $0x38] sm:$0xff]
  %v1755 = vld [vmem:[%s3 + $0x40] sm:$0xff]
  %v1756 = vld [vmem:[%s3 + $0x48] sm:$0xff]
  %v1757 = vld [vmem:[%s3 + $0x50] sm:$0xff]
  %v1758 = vld [vmem:[%s3 + $0x58] sm:$0xff]
  %v1759 = vld [vmem:[%s3 + $0x60] sm:$0xff]
  %v1760 = vld [vmem:[%s3 + $0x68] sm:$0xff]
  %v1761 = vld [vmem:[%s3 + $0x70] sm:$0xff]
  %v1762 = vld [vmem:[%s3 + $0x78] sm:$0xff]
  %1763 = vmatpush.msra.mxu0 %v1762
  %1764 = vmatpush.msra.mxu0 %v1761
  %1765 = vmatpush.msra.mxu0 %v1760
  %1766 = vmatpush.msra.mxu0 %v1759
  %1767 = vmatpush.msra.mxu0 %v1758
  %1768 = vmatpush.msra.mxu0 %v1757
  %1769 = vmatpush.msra.mxu0 %v1756
  %1770 = vmatpush.msra.mxu0 %v1755
  %1771 = vmatpush.msra.mxu0 %v1754
  %1772 = vmatpush.msra.mxu0 %v1753
  %1773 = vmatpush.msra.mxu0 %v1752
  %1774 = vmatpush.msra.mxu0 %v1751
  %1775 = vmatpush.msra.mxu0 %v1750
  %1776 = vmatpush.msra.mxu0 %v1749
  %1777 = vmatpush.msra.mxu0 %v1748
  %1778 = vmatpush.msra.mxu0 %v1747
  %1779 = vmatmul.f32.gmra.mxu0 %v1683
  %v1780 = vpop.f32.mrf.mxu0
  %v1781 = vadd.f32 0.0, %v1780
  %1782 = vmatmul.f32.gmra.mxu0 %v1684
  %v1783 = vpop.f32.mrf.mxu0
  %v1784 = vadd.f32 0.0, %v1783
  %1785 = vmatmul.f32.gmra.mxu0 %v1685
  %v1786 = vpop.f32.mrf.mxu0
  %v1787 = vadd.f32 0.0, %v1786
  %1788 = vmatmul.f32.gmra.mxu0 %v1686
  %v1789 = vpop.f32.mrf.mxu0
  %v1790 = vadd.f32 0.0, %v1789
  %1791 = vmatmul.f32.gmra.mxu0 %v1687
  %v1792 = vpop.f32.mrf.mxu0
  %v1793 = vadd.f32 0.0, %v1792
  %1794 = vmatmul.f32.gmra.mxu0 %v1688
  %v1795 = vpop.f32.mrf.mxu0
  %v1796 = vadd.f32 0.0, %v1795
  %1797 = vmatmul.f32.gmra.mxu0 %v1689
  %v1798 = vpop.f32.mrf.mxu0
  %v1799 = vadd.f32 0.0, %v1798
  %1800 = vmatmul.f32.gmra.mxu0 %v1690
  %v1801 = vpop.f32.mrf.mxu0
  %v1802 = vadd.f32 0.0, %v1801
  %1803 = vmatmul.f32.gmra.mxu0 %v1691
  %v1804 = vpop.f32.mrf.mxu0
  %v1805 = vadd.f32 0.0, %v1804
  %1806 = vmatmul.f32.gmra.mxu0 %v1692
  %v1807 = vpop.f32.mrf.mxu0
  %v1808 = vadd.f32 0.0, %v1807
  %1809 = vmatmul.f32.gmra.mxu0 %v1693
  %v1810 = vpop.f32.mrf.mxu0
  %v1811 = vadd.f32 0.0, %v1810
  %1812 = vmatmul.f32.gmra.mxu0 %v1694
  %v1813 = vpop.f32.mrf.mxu0
  %v1814 = vadd.f32 0.0, %v1813
  %1815 = vmatmul.f32.gmra.mxu0 %v1695
  %v1816 = vpop.f32.mrf.mxu0
  %v1817 = vadd.f32 0.0, %v1816
  %1818 = vmatmul.f32.gmra.mxu0 %v1696
  %v1819 = vpop.f32.mrf.mxu0
  %v1820 = vadd.f32 0.0, %v1819
  %1821 = vmatmul.f32.gmra.mxu0 %v1697
  %v1822 = vpop.f32.mrf.mxu0
  %v1823 = vadd.f32 0.0, %v1822
  %1824 = vmatmul.f32.gmra.mxu0 %v1698
  %v1825 = vpop.f32.mrf.mxu0
  %v1826 = vadd.f32 0.0, %v1825
  %1827 = vmatmul.f32.gmra.mxu0 %v1699
  %v1828 = vpop.f32.mrf.mxu0
  %v1829 = vadd.f32 0.0, %v1828
  %1830 = vmatmul.f32.gmra.mxu0 %v1700
  %v1831 = vpop.f32.mrf.mxu0
  %v1832 = vadd.f32 0.0, %v1831
  %1833 = vmatmul.f32.gmra.mxu0 %v1701
  %v1834 = vpop.f32.mrf.mxu0
  %v1835 = vadd.f32 0.0, %v1834
  %1836 = vmatmul.f32.gmra.mxu0 %v1702
  %v1837 = vpop.f32.mrf.mxu0
  %v1838 = vadd.f32 0.0, %v1837
  %1839 = vmatmul.f32.gmra.mxu0 %v1703
  %v1840 = vpop.f32.mrf.mxu0
  %v1841 = vadd.f32 0.0, %v1840
  %1842 = vmatmul.f32.gmra.mxu0 %v1704
  %v1843 = vpop.f32.mrf.mxu0
  %v1844 = vadd.f32 0.0, %v1843
  %1845 = vmatmul.f32.gmra.mxu0 %v1705
  %v1846 = vpop.f32.mrf.mxu0
  %v1847 = vadd.f32 0.0, %v1846
  %1848 = vmatmul.f32.gmra.mxu0 %v1706
  %v1849 = vpop.f32.mrf.mxu0
  %v1850 = vadd.f32 0.0, %v1849
  %1851 = vmatmul.f32.gmra.mxu0 %v1707
  %v1852 = vpop.f32.mrf.mxu0
  %v1853 = vadd.f32 0.0, %v1852
  %1854 = vmatmul.f32.gmra.mxu0 %v1708
  %v1855 = vpop.f32.mrf.mxu0
  %v1856 = vadd.f32 0.0, %v1855
  %1857 = vmatmul.f32.gmra.mxu0 %v1709
  %v1858 = vpop.f32.mrf.mxu0
  %v1859 = vadd.f32 0.0, %v1858
  %1860 = vmatmul.f32.gmra.mxu0 %v1710
  %v1861 = vpop.f32.mrf.mxu0
  %v1862 = vadd.f32 0.0, %v1861
  %1863 = vmatmul.f32.gmra.mxu0 %v1711
  %v1864 = vpop.f32.mrf.mxu0
  %v1865 = vadd.f32 0.0, %v1864
  %1866 = vmatmul.f32.gmra.mxu0 %v1712
  %v1867 = vpop.f32.mrf.mxu0
  %v1868 = vadd.f32 0.0, %v1867
  %1869 = vmatmul.f32.gmra.mxu0 %v1713
  %v1870 = vpop.f32.mrf.mxu0
  %v1871 = vadd.f32 0.0, %v1870
  %1872 = vmatmul.f32.gmra.mxu0 %v1714
  %v1873 = vpop.f32.mrf.mxu0
  %v1874 = vadd.f32 0.0, %v1873
  %1875 = vdwg.mxu0
  %v1876 = vadd.f32 %v1715, %v1781
  %v1877 = vadd.f32 %v1716, %v1784
  %v1878 = vadd.f32 %v1717, %v1787
  %v1879 = vadd.f32 %v1718, %v1790
  %v1880 = vadd.f32 %v1719, %v1793
  %v1881 = vadd.f32 %v1720, %v1796
  %v1882 = vadd.f32 %v1721, %v1799
  %v1883 = vadd.f32 %v1722, %v1802
  %v1884 = vadd.f32 %v1723, %v1805
  %v1885 = vadd.f32 %v1724, %v1808
  %v1886 = vadd.f32 %v1725, %v1811
  %v1887 = vadd.f32 %v1726, %v1814
  %v1888 = vadd.f32 %v1727, %v1817
  %v1889 = vadd.f32 %v1728, %v1820
  %v1890 = vadd.f32 %v1729, %v1823
  %v1891 = vadd.f32 %v1730, %v1826
  %v1892 = vadd.f32 %v1731, %v1829
  %v1893 = vadd.f32 %v1732, %v1832
  %v1894 = vadd.f32 %v1733, %v1835
  %v1895 = vadd.f32 %v1734, %v1838
  %v1896 = vadd.f32 %v1735, %v1841
  %v1897 = vadd.f32 %v1736, %v1844
  %v1898 = vadd.f32 %v1737, %v1847
  %v1899 = vadd.f32 %v1738, %v1850
  %v1900 = vadd.f32 %v1739, %v1853
  %v1901 = vadd.f32 %v1740, %v1856
  %v1902 = vadd.f32 %v1741, %v1859
  %v1903 = vadd.f32 %v1742, %v1862
  %v1904 = vadd.f32 %v1743, %v1865
  %v1905 = vadd.f32 %v1744, %v1868
  %v1906 = vadd.f32 %v1745, %v1871
  %v1907 = vadd.f32 %v1746, %v1874
  %1908 = vst.msk [vmem:[#allocation2] sm:$0xff] %vm97, %v1876
  %1909 = vst.msk [vmem:[#allocation2 + $0x8] sm:$0xff] %vm97, %v1877
  %1910 = vst.msk [vmem:[#allocation2 + $0x10] sm:$0xff] %vm97, %v1878
  %1911 = vst.msk [vmem:[#allocation2 + $0x18] sm:$0xff] %vm97, %v1879
  %1912 = vst.msk [vmem:[#allocation2 + $0x20] sm:$0xff] %vm97, %v1880
  %1913 = vst.msk [vmem:[#allocation2 + $0x28] sm:$0xff] %vm97, %v1881
  %1914 = vst.msk [vmem:[#allocation2 + $0x30] sm:$0xff] %vm97, %v1882
  %1915 = vst.msk [vmem:[#allocation2 + $0x38] sm:$0xff] %vm97, %v1883
  %1916 = vst.msk [vmem:[#allocation2 + $0x40] sm:$0xff] %vm97, %v1884
  %1917 = vst.msk [vmem:[#allocation2 + $0x48] sm:$0xff] %vm97, %v1885
  %1918 = vst.msk [vmem:[#allocation2 + $0x50] sm:$0xff] %vm97, %v1886
  %1919 = vst.msk [vmem:[#allocation2 + $0x58] sm:$0xff] %vm97, %v1887
  %1920 = vst.msk [vmem:[#allocation2 + $0x60] sm:$0xff] %vm97, %v1888
  %1921 = vst.msk [vmem:[#allocation2 + $0x68] sm:$0xff] %vm97, %v1889
  %1922 = vst.msk [vmem:[#allocation2 + $0x70] sm:$0xff] %vm97, %v1890
  %1923 = vst.msk [vmem:[#allocation2 + $0x78] sm:$0xff] %vm97, %v1891
  %1924 = vst.msk [vmem:[#allocation2 + $0x80] sm:$0xff] %vm97, %v1892
  %1925 = vst.msk [vmem:[#allocation2 + $0x88] sm:$0xff] %vm97, %v1893
  %1926 = vst.msk [vmem:[#allocation2 + $0x90] sm:$0xff] %vm97, %v1894
  %1927 = vst.msk [vmem:[#allocation2 + $0x98] sm:$0xff] %vm97, %v1895
  %1928 = vst.msk [vmem:[#allocation2 + $0xa0] sm:$0xff] %vm97, %v1896
  %1929 = vst.msk [vmem:[#allocation2 + $0xa8] sm:$0xff] %vm97, %v1897
  %1930 = vst.msk [vmem:[#allocation2 + $0xb0] sm:$0xff] %vm97, %v1898
  %1931 = vst.msk [vmem:[#allocation2 + $0xb8] sm:$0xff] %vm97, %v1899
  %1932 = vst.msk [vmem:[#allocation2 + $0xc0] sm:$0xff] %vm97, %v1900
  %1933 = vst.msk [vmem:[#allocation2 + $0xc8] sm:$0xff] %vm97, %v1901
  %1934 = vst.msk [vmem:[#allocation2 + $0xd0] sm:$0xff] %vm97, %v1902
  %1935 = vst.msk [vmem:[#allocation2 + $0xd8] sm:$0xff] %vm97, %v1903
  %1936 = vst.msk [vmem:[#allocation2 + $0xe0] sm:$0xff] %vm97, %v1904
  %1937 = vst.msk [vmem:[#allocation2 + $0xe8] sm:$0xff] %vm97, %v1905
  %1938 = vst.msk [vmem:[#allocation2 + $0xf0] sm:$0xff] %vm97, %v1906
  %1939 = vst.msk [vmem:[#allocation2 + $0xf8] sm:$0xff] %vm97, %v1907
  // Predicated region
  $region26: #{mlp_forward.1} parent=0 // pred_check
    %p1940 = pneg %p20
  $region27: #{mlp_forward.1} parent=0 // pred_check_branch
    %1942 = sbr.rel (%p1940) target = $region29
  $region28: #{mlp_forward.1} parent=0 // pred_region
    %v1943 = vld [vmem:[#allocation2] sm:$0xff]
    %v1944 = vld [vmem:[#allocation2 + $0x8] sm:$0xff]
    %v1945 = vld [vmem:[#allocation2 + $0x10] sm:$0xff]
    %v1946 = vld [vmem:[#allocation2 + $0x18] sm:$0xff]
    %v1947 = vld [vmem:[#allocation2 + $0x20] sm:$0xff]
    %v1948 = vld [vmem:[#allocation2 + $0x28] sm:$0xff]
    %v1949 = vld [vmem:[#allocation2 + $0x30] sm:$0xff]
    %v1950 = vld [vmem:[#allocation2 + $0x38] sm:$0xff]
    %v1951 = vld [vmem:[#allocation2 + $0x40] sm:$0xff]
    %v1952 = vld [vmem:[#allocation2 + $0x48] sm:$0xff]
    %v1953 = vld [vmem:[#allocation2 + $0x50] sm:$0xff]
    %v1954 = vld [vmem:[#allocation2 + $0x58] sm:$0xff]
    %v1955 = vld [vmem:[#allocation2 + $0x60] sm:$0xff]
    %v1956 = vld [vmem:[#allocation2 + $0x68] sm:$0xff]
    %v1957 = vld [vmem:[#allocation2 + $0x70] sm:$0xff]
    %v1958 = vld [vmem:[#allocation2 + $0x78] sm:$0xff]
    %v1959 = vld [vmem:[#allocation2 + $0x80] sm:$0xff]
    %v1960 = vld [vmem:[#allocation2 + $0x88] sm:$0xff]
    %v1961 = vld [vmem:[#allocation2 + $0x90] sm:$0xff]
    %v1962 = vld [vmem:[#allocation2 + $0x98] sm:$0xff]
    %v1963 = vld [vmem:[#allocation2 + $0xa0] sm:$0xff]
    %v1964 = vld [vmem:[#allocation2 + $0xa8] sm:$0xff]
    %v1965 = vld [vmem:[#allocation2 + $0xb0] sm:$0xff]
    %v1966 = vld [vmem:[#allocation2 + $0xb8] sm:$0xff]
    %v1967 = vld [vmem:[#allocation2 + $0xc0] sm:$0xff]
    %v1968 = vld [vmem:[#allocation2 + $0xc8] sm:$0xff]
    %v1969 = vld [vmem:[#allocation2 + $0xd0] sm:$0xff]
    %v1970 = vld [vmem:[#allocation2 + $0xd8] sm:$0xff]
    %v1971 = vld [vmem:[#allocation2 + $0xe0] sm:$0xff]
    %v1972 = vld [vmem:[#allocation2 + $0xe8] sm:$0xff]
    %v1973 = vld [vmem:[#allocation2 + $0xf0] sm:$0xff]
    %v1974 = vld [vmem:[#allocation2 + $0xf8] sm:$0xff]
    %v1975 = vld [vmem:[%s4] sm:$0x1]
    %v1977 = vperm.slane %v1975, 0
    %v1979 = vadd.f32 %v1943, %v1977
    %v1980 = vadd.f32 %v1944, %v1977
    %v1981 = vadd.f32 %v1945, %v1977
    %v1982 = vadd.f32 %v1946, %v1977
    %v1983 = vadd.f32 %v1947, %v1977
    %v1984 = vadd.f32 %v1948, %v1977
    %v1985 = vadd.f32 %v1949, %v1977
    %v1986 = vadd.f32 %v1950, %v1977
    %v1987 = vadd.f32 %v1951, %v1977
    %v1988 = vadd.f32 %v1952, %v1977
    %v1989 = vadd.f32 %v1953, %v1977
    %v1990 = vadd.f32 %v1954, %v1977
    %v1991 = vadd.f32 %v1955, %v1977
    %v1992 = vadd.f32 %v1956, %v1977
    %v1993 = vadd.f32 %v1957, %v1977
    %v1994 = vadd.f32 %v1958, %v1977
    %v1995 = vadd.f32 %v1959, %v1977
    %v1996 = vadd.f32 %v1960, %v1977
    %v1997 = vadd.f32 %v1961, %v1977
    %v1998 = vadd.f32 %v1962, %v1977
    %v1999 = vadd.f32 %v1963, %v1977
    %v2000 = vadd.f32 %v1964, %v1977
    %v2001 = vadd.f32 %v1965, %v1977
    %v2002 = vadd.f32 %v1966, %v1977
    %v2003 = vadd.f32 %v1967, %v1977
    %v2004 = vadd.f32 %v1968, %v1977
    %v2005 = vadd.f32 %v1969, %v1977
    %v2006 = vadd.f32 %v1970, %v1977
    %v2007 = vadd.f32 %v1971, %v1977
    %v2008 = vadd.f32 %v1972, %v1977
    %v2009 = vadd.f32 %v1973, %v1977
    %v2010 = vadd.f32 %v1974, %v1977
    %2011 = vst.msk [vmem:[%s5] sm:$0xff] %vm97, %v1979
    %2012 = vst.msk [vmem:[%s5 + $0x8] sm:$0xff] %vm97, %v1980
    %2013 = vst.msk [vmem:[%s5 + $0x10] sm:$0xff] %vm97, %v1981
    %2014 = vst.msk [vmem:[%s5 + $0x18] sm:$0xff] %vm97, %v1982
    %2015 = vst.msk [vmem:[%s5 + $0x20] sm:$0xff] %vm97, %v1983
    %2016 = vst.msk [vmem:[%s5 + $0x28] sm:$0xff] %vm97, %v1984
    %2017 = vst.msk [vmem:[%s5 + $0x30] sm:$0xff] %vm97, %v1985
    %2018 = vst.msk [vmem:[%s5 + $0x38] sm:$0xff] %vm97, %v1986
    %2019 = vst.msk [vmem:[%s5 + $0x40] sm:$0xff] %vm97, %v1987
    %2020 = vst.msk [vmem:[%s5 + $0x48] sm:$0xff] %vm97, %v1988
    %2021 = vst.msk [vmem:[%s5 + $0x50] sm:$0xff] %vm97, %v1989
    %2022 = vst.msk [vmem:[%s5 + $0x58] sm:$0xff] %vm97, %v1990
    %2023 = vst.msk [vmem:[%s5 + $0x60] sm:$0xff] %vm97, %v1991
    %2024 = vst.msk [vmem:[%s5 + $0x68] sm:$0xff] %vm97, %v1992
    %2025 = vst.msk [vmem:[%s5 + $0x70] sm:$0xff] %vm97, %v1993
    %2026 = vst.msk [vmem:[%s5 + $0x78] sm:$0xff] %vm97, %v1994
    %2027 = vst.msk [vmem:[%s5 + $0x80] sm:$0xff] %vm97, %v1995
    %2028 = vst.msk [vmem:[%s5 + $0x88] sm:$0xff] %vm97, %v1996
    %2029 = vst.msk [vmem:[%s5 + $0x90] sm:$0xff] %vm97, %v1997
    %2030 = vst.msk [vmem:[%s5 + $0x98] sm:$0xff] %vm97, %v1998
    %2031 = vst.msk [vmem:[%s5 + $0xa0] sm:$0xff] %vm97, %v1999
    %2032 = vst.msk [vmem:[%s5 + $0xa8] sm:$0xff] %vm97, %v2000
    %2033 = vst.msk [vmem:[%s5 + $0xb0] sm:$0xff] %vm97, %v2001
    %2034 = vst.msk [vmem:[%s5 + $0xb8] sm:$0xff] %vm97, %v2002
    %2035 = vst.msk [vmem:[%s5 + $0xc0] sm:$0xff] %vm97, %v2003
    %2036 = vst.msk [vmem:[%s5 + $0xc8] sm:$0xff] %vm97, %v2004
    %2037 = vst.msk [vmem:[%s5 + $0xd0] sm:$0xff] %vm97, %v2005
    %2038 = vst.msk [vmem:[%s5 + $0xd8] sm:$0xff] %vm97, %v2006
    %2039 = vst.msk [vmem:[%s5 + $0xe0] sm:$0xff] %vm97, %v2007
    %2040 = vst.msk [vmem:[%s5 + $0xe8] sm:$0xff] %vm97, %v2008
    %2041 = vst.msk [vmem:[%s5 + $0xf0] sm:$0xff] %vm97, %v2009
    %2042 = vst.msk [vmem:[%s5 + $0xf8] sm:$0xff] %vm97, %v2010
  $region29: #{mlp_forward.1} parent=0 // pred_fallthru
    _
  // Predicated region
  $region30: #{mlp_forward.1} parent=0 // pred_check
    _
  $region31: #{mlp_forward.1} parent=0 // pred_check_branch
    %2044 = sbr.rel (0) target = $region33
  $region32: #{mlp_forward.1} parent=0 // pred_region
    _
  $region33: #{mlp_forward.1} parent=0 // pred_fallthru
    _
  // Predicated region
  $region34: #{mlp_forward.1} parent=0 // pred_check
    _
  $region35: #{mlp_forward.1} parent=0 // pred_check_branch
    %2046 = sbr.rel (0) target = $region37
  $region36: #{mlp_forward.1} parent=0 // pred_region
    _
  $region37: #{mlp_forward.1} parent=0 // pred_fallthru
    _

</llo_original>
